<compile_context>
chip_gen: v5e
topology: v5e:2x2
jax: 0.10.0
libtpu: 0.0.40
codegen_flags: <defaults>
</compile_context>

<pallas_src>
import functools

import jax
import jax.numpy as jnp
from jax import lax
from jax.experimental import pallas as pl
from jax.experimental.pallas import tpu as pltpu

BN_EPS = 1e-5      # ConvBnRelu: nn.BatchNorm2d(eps=1e-5)
ATT_EPS = 1e-6     # Attention: eps=1e-6


# ---------------------------------------------------------------------------
# Fused kernel: one grid step == one batch element.
# Refs are channel-major: (channels, n_pix) with n_pix = H*W on the lane axis.
# All matmul operands are bf16; accumulation and pointwise math are f32.
# ---------------------------------------------------------------------------
def _aam_kernel(s5_ref, s4_ref, s3_ref, s2_ref,
                wc5_ref, wc4_ref, wc3_ref, wc2_ref, bc_ref,
                wqkv_ref, bqkv_ref,
                o_ref, *, n_pix, cq):
    # --- 1x1 conv (+ folded BatchNorm) + ReLU, accumulated per pyramid level.
    acc = jnp.dot(wc5_ref[...], s5_ref[...], preferred_element_type=jnp.float32)
    acc = acc + jnp.dot(wc4_ref[...], s4_ref[...],
                        preferred_element_type=jnp.float32)
    acc = acc + jnp.dot(wc3_ref[...], s3_ref[...],
                        preferred_element_type=jnp.float32)
    acc = acc + jnp.dot(wc2_ref[...], s2_ref[...],
                        preferred_element_type=jnp.float32)
    feat = jnp.maximum(acc + bc_ref[...], 0.0)                  # (C, N) f32
    feat_b = feat.astype(jnp.bfloat16)

    # --- fused Q/K/V projection: one M = 2*Cq + C matmul -------------------
    qkv = jnp.dot(wqkv_ref[...], feat_b,
                  preferred_element_type=jnp.float32) + bqkv_ref[...]
    q = qkv[0:cq, :]                                            # (Cq, N)
    k = qkv[cq:2 * cq, :]                                       # (Cq, N)
    v = qkv[2 * cq:, :]                                         # (C, N), gamma folded

    # l2 normalization over the channel axis (per pixel column) -- EUP rsqrt.
    qn = q * lax.rsqrt(jnp.sum(q * q, axis=0, keepdims=True))   # (Cq, N)
    kn = k * lax.rsqrt(jnp.sum(k * k, axis=0, keepdims=True))   # (Cq, N)

    # tailor_sum = 1 / (N + Q . (sum_n K + eps))                 -> (1, N)
    sum_k = jnp.sum(kn, axis=1, keepdims=True)                  # (Cq, 1)
    denom = float(n_pix) + jnp.sum(qn * (sum_k + ATT_EPS),
                                   axis=0, keepdims=True)       # (1, N)
    tailor = pl.reciprocal(denom, approx=True)                  # (1, N)

    # value_sum, matrix = K V^T, matrix_sum = value_sum + (Q^T matrix)^T
    v_sum = jnp.sum(v, axis=1, keepdims=True)                   # (C, 1)
    qn_b = qn.astype(jnp.bfloat16)
    kn_b = kn.astype(jnp.bfloat16)
    v_b = v.astype(jnp.bfloat16)
    mt = lax.dot_general(v_b, kn_b, (((1,), (1,)), ((), ())),   # (C, Cq)
                         preferred_element_type=jnp.float32)
    ms = v_sum + jnp.dot(mt.astype(jnp.bfloat16), qn_b,
                         preferred_element_type=jnp.float32)    # (C, N)

    # `gamma * weight_value + feat`; gamma is already folded into wqkv's V rows.
    o_ref[...] = (ms * tailor + feat).astype(o_ref.dtype)


# ---------------------------------------------------------------------------
# Wrapper: NCHW in / NCHW out (only free reshapes at the boundary).
# NOTE: the original torch code's final `.view(B, C, height, width)` requires a
# square spatial map (otherwise the residual add fails); we assume H == W.
# ---------------------------------------------------------------------------
def attention_aggregation_forward(s5, s4, s3, s2, params):
    (wc, bn_gamma, bn_beta, bn_mean, bn_var,
     wq, bq, wk, bk, wv, bv, att_gamma) = params

    B, _, H, W = s5.shape
    n_pix = H * W
    C = wc.shape[0]
    Cq = wq.shape[0]

    # Fold BatchNorm (running stats) into the 1x1 conv (conv has no bias).
    scale = bn_gamma / jnp.sqrt(bn_var + BN_EPS)                 # (C,)
    wc_eff = wc * scale[:, None]                                 # (C, Cin)
    bc_eff = (bn_beta - bn_mean * scale)[:, None]                # (C, 1) f32

    # Fold attention gamma into the value projection (output is linear in V)
    # and stack Q/K/V into one fused projection weight / bias.
    wqkv = jnp.concatenate([wq, wk, att_gamma * wv], axis=0)     # (2Cq + C, C)
    bqkv = jnp.concatenate([bq, bk, att_gamma * bv], axis=0)[:, None]  # (2Cq+C, 1)

    def as_cn(s):                                                # (B,c,H,W)->(B,c,N)
        b, c, h, w = s.shape
        return s.reshape(b, c, h * w).astype(jnp.bfloat16)

    inputs = [as_cn(s5), as_cn(s4), as_cn(s3), as_cn(s2)]
    chans = [a.shape[1] for a in inputs]
    in_chan = sum(chans)

    # Pre-split the conv weight along Cin (one slice per pyramid level) so the
    # kernel never materializes the channel concat.
    offsets = []
    acc = 0
    for c in chans:
        offsets.append(acc)
        acc += c
    wc_split = [wc_eff[:, off:off + c].astype(jnp.bfloat16)
                for off, c in zip(offsets, chans)]
    wqkv_b = wqkv.astype(jnp.bfloat16)

    def w_spec(shape):
        return pl.BlockSpec(shape, lambda b: (0, 0))

    in_specs = [
        pl.BlockSpec((pl.Squeezed(), chans[0], n_pix), lambda b: (b, 0, 0)),
        pl.BlockSpec((pl.Squeezed(), chans[1], n_pix), lambda b: (b, 0, 0)),
        pl.BlockSpec((pl.Squeezed(), chans[2], n_pix), lambda b: (b, 0, 0)),
        pl.BlockSpec((pl.Squeezed(), chans[3], n_pix), lambda b: (b, 0, 0)),
        w_spec(wc_split[0].shape), w_spec(wc_split[1].shape),
        w_spec(wc_split[2].shape), w_spec(wc_split[3].shape),
        w_spec(bc_eff.shape),
        w_spec(wqkv_b.shape), w_spec(bqkv.shape),
    ]
    out_specs = pl.BlockSpec((pl.Squeezed(), C, n_pix), lambda b: (b, 0, 0))

    # Advisory cost estimate so XLA schedules neighbors sensibly.
    flops = 2 * B * n_pix * (in_chan * C + (2 * Cq + C) * C + 2 * C * Cq + Cq)
    bytes_accessed = (2 * B * in_chan * n_pix            # bf16 inputs
                      + 4 * B * C * n_pix                # f32 output
                      + 2 * (wc_eff.size + wqkv.size)    # bf16 weights
                      + 4 * (bc_eff.size + bqkv.size))   # f32 biases
    cost = pl.CostEstimate(flops=int(flops),
                           transcendentals=int(3 * B * n_pix),
                           bytes_accessed=int(bytes_accessed))

    kern = functools.partial(_aam_kernel, n_pix=n_pix, cq=Cq)

    out = pl.pallas_call(
        kern,
        out_shape=jax.ShapeDtypeStruct((B, C, n_pix), jnp.float32),
        grid_spec=pltpu.PrefetchScalarGridSpec(
            num_scalar_prefetch=0,
            grid=(B,),
            in_specs=in_specs,
            out_specs=out_specs,
        ),
        compiler_params=pltpu.CompilerParams(
            dimension_semantics=("parallel",),
            vmem_limit_bytes=64 << 20,
        ),
        cost_estimate=cost,
    )(*inputs, *wc_split, bc_eff, wqkv_b, bqkv)

    return out.reshape(B, C, H, W)


# ---------------------------------------------------------------------------
# Parameter init + pure-JAX reference (mirrors the torch forward exactly).
# ---------------------------------------------------------------------------
def init_params(key, in_chan, out_chan, scale=8):
    cq = out_chan // scale
    ks = jax.random.split(key, 12)
    wc = 0.1 * jax.random.normal(ks[0], (out_chan, in_chan), jnp.float32)
    bn_gamma = 1.0 + 0.1 * jax.random.normal(ks[1], (out_chan,), jnp.float32)
    bn_beta = 0.05 * jax.random.normal(ks[2], (out_chan,), jnp.float32)
    bn_mean = 0.05 * jax.random.normal(ks[3], (out_chan,), jnp.float32)
    bn_var = 0.5 + 0.5 * jnp.abs(jax.random.normal(ks[4], (out_chan,), jnp.float32))
    wq = 0.1 * jax.random.normal(ks[5], (cq, out_chan), jnp.float32)
    bq = 0.05 * jax.random.normal(ks[6], (cq,), jnp.float32)
    wk = 0.1 * jax.random.normal(ks[7], (cq, out_chan), jnp.float32)
    bk = 0.05 * jax.random.normal(ks[8], (cq,), jnp.float32)
    wv = 0.1 * jax.random.normal(ks[9], (out_chan, out_chan), jnp.float32)
    bv = 0.05 * jax.random.normal(ks[10], (out_chan,), jnp.float32)
    # nn.Parameter(torch.zeros(1)) at init; use a nonzero value so the
    # attention branch is actually exercised by the test.
    att_gamma = 0.5 + 0.1 * jax.random.normal(ks[11], (), jnp.float32)
    return (wc, bn_gamma, bn_beta, bn_mean, bn_var,
            wq, bq, wk, bk, wv, bv, att_gamma)


def reference_forward(s5, s4, s3, s2, params):
    (wc, bn_gamma, bn_beta, bn_mean, bn_var,
     wq, bq, wk, bk, wv, bv, att_gamma) = params
    x = jnp.concatenate([s5, s4, s3, s2], axis=1)                # (B, Cin, H, W)
    B, _, H, W = x.shape
    C = wc.shape[0]
    n = H * W

    feat = jnp.einsum('oc,bchw->bohw', wc, x)
    feat = (feat - bn_mean[None, :, None, None]) \
        / jnp.sqrt(bn_var + BN_EPS)[None, :, None, None]
    feat = feat * bn_gamma[None, :, None, None] + bn_beta[None, :, None, None]
    feat = jnp.maximum(feat, 0.0)

    Q = (jnp.einsum('oc,bchw->bohw', wq, feat) + bq[None, :, None, None]).reshape(B, -1, n)
    K = (jnp.einsum('oc,bchw->bohw', wk, feat) + bk[None, :, None, None]).reshape(B, -1, n)
    V = (jnp.einsum('oc,bchw->bohw', wv, feat) + bv[None, :, None, None]).reshape(B, C, n)

    def l2n(z):
        return z / jnp.linalg.norm(z, axis=-2, keepdims=True)

    Qn = jnp.transpose(l2n(Q), (0, 2, 1))                        # (B, N, Cq)
    Kn = l2n(K)                                                  # (B, Cq, N)
    tailor = 1.0 / (n + jnp.einsum('bnc,bc->bn', Qn, jnp.sum(Kn, axis=-1) + ATT_EPS))
    value_sum = jnp.sum(V, axis=-1)                              # (B, C)
    matrix = jnp.einsum('bmn,bcn->bmc', Kn, V)                   # (B, Cq, C)
    matrix_sum = value_sum[:, :, None] + jnp.einsum('bnm,bmc->bcn', Qn, matrix)
    weight_value = matrix_sum * tailor[:, None, :]               # (B, C, N)
    atten = att_gamma * weight_value.reshape(B, C, H, W)
    return atten + feat


if __name__ == "__main__":
    key = jax.random.PRNGKey(0)
    B, H, W = 2, 16, 16
    per_level = (16, 16, 16, 16)          # channels of s5, s4, s3, s2
    in_chan, out_chan = sum(per_level), 64  # out_chan % 8 == 0 (Attention scale=8)

    ks = jax.random.split(key, 5)
    s5 = jax.random.normal(ks[0], (B, per_level[0], H, W), jnp.float32)
    s4 = jax.random.normal(ks[1], (B, per_level[1], H, W), jnp.float32)
    s3 = jax.random.normal(ks[2], (B, per_level[2], H, W), jnp.float32)
    s2 = jax.random.normal(ks[3], (B, per_level[3], H, W), jnp.float32)
    params = init_params(ks[4], in_chan, out_chan)

    fwd = jax.jit(lambda a, b, c, d: attention_aggregation_forward(a, b, c, d, params))
    out = jax.block_until_ready(fwd(s5, s4, s3, s2))
    assert out.shape == (B, out_chan, H, W), out.shape

    ref = reference_forward(s5, s4, s3, s2, params)
    # bf16 MXU operands (f32 accumulate) + approx EUP reciprocal/rsqrt: the
    # comparison tolerance is relaxed from 1e-3 to ~3e-2 accordingly.
    if not jnp.allclose(out, ref, rtol=3e-2, atol=3e-2):
        raise AssertionError(
            f"mismatch vs reference, max abs err = {jnp.max(jnp.abs(out - ref))}")
    print("KERNEL_OK")
</pallas_src>

<mosaic_0001>
module attributes {stable_mosaic.version = 11 : i64} {
  func.func @_aam_kernel(%arg0: i32, %arg1: memref<1x16x256xbf16, #tpu.memory_space<vmem>>, %arg2: memref<1x16x256xbf16, #tpu.memory_space<vmem>>, %arg3: memref<1x16x256xbf16, #tpu.memory_space<vmem>>, %arg4: memref<1x16x256xbf16, #tpu.memory_space<vmem>>, %arg5: memref<64x16xbf16, #tpu.memory_space<vmem>>, %arg6: memref<64x16xbf16, #tpu.memory_space<vmem>>, %arg7: memref<64x16xbf16, #tpu.memory_space<vmem>>, %arg8: memref<64x16xbf16, #tpu.memory_space<vmem>>, %arg9: memref<64x1xf32, #tpu.memory_space<vmem>>, %arg10: memref<80x64xbf16, #tpu.memory_space<vmem>>, %arg11: memref<80x1xf32, #tpu.memory_space<vmem>>, %arg12: memref<1x64x256xf32, #tpu.memory_space<vmem>>) attributes {dimension_semantics = [#tpu.dimension_semantics<parallel>], iteration_bounds = array<i64: 2>, scalar_prefetch = 0 : i64, scratch_operands = 0 : i64, tpu.core_type = #tpu.core_type<tc>, window_params = [{transform_indices = @transform_0, window_bounds = array<i64: 1, 16, 256>}, {transform_indices = @transform_1, window_bounds = array<i64: 1, 16, 256>}, {transform_indices = @transform_2, window_bounds = array<i64: 1, 16, 256>}, {transform_indices = @transform_3, window_bounds = array<i64: 1, 16, 256>}, {pipeline_mode = #tpu.pipeline_mode<synchronous>, transform_indices = @transform_4, window_bounds = array<i64: 64, 16>}, {pipeline_mode = #tpu.pipeline_mode<synchronous>, transform_indices = @transform_5, window_bounds = array<i64: 64, 16>}, {pipeline_mode = #tpu.pipeline_mode<synchronous>, transform_indices = @transform_6, window_bounds = array<i64: 64, 16>}, {pipeline_mode = #tpu.pipeline_mode<synchronous>, transform_indices = @transform_7, window_bounds = array<i64: 64, 16>}, {pipeline_mode = #tpu.pipeline_mode<synchronous>, transform_indices = @transform_8, window_bounds = array<i64: 64, 1>}, {pipeline_mode = #tpu.pipeline_mode<synchronous>, transform_indices = @transform_9, window_bounds = array<i64: 80, 64>}, {pipeline_mode = #tpu.pipeline_mode<synchronous>, transform_indices = @transform_10, window_bounds = array<i64: 80, 1>}, {transform_indices = @transform_11, window_bounds = array<i64: 1, 64, 256>}]} {
    %c0 = arith.constant 0 : index
    %c0_0 = arith.constant 0 : index
    %0 = vector.load %arg5[%c0, %c0_0] : memref<64x16xbf16, #tpu.memory_space<vmem>>, vector<64x16xbf16>
    %c0_1 = arith.constant 0 : index
    %c0_2 = arith.constant 0 : index
    %c0_3 = arith.constant 0 : index
    %1 = vector.load %arg1[%c0_1, %c0_2, %c0_3] : memref<1x16x256xbf16, #tpu.memory_space<vmem>>, vector<1x16x256xbf16>
    %2 = vector.shape_cast %1 : vector<1x16x256xbf16> to vector<16x256xbf16>
    %cst = arith.constant dense<0.000000e+00> : vector<64x256xf32>
    %3 = tpu.matmul %0, %2, %cst {dimension_numbers = #tpu.dot_dimension_numbers<[1], [0], [0], [1], [0, 0, 1, 1], [], []>} : vector<64x16xbf16>, vector<16x256xbf16>, vector<64x256xf32> -> vector<64x256xf32>
    %c0_4 = arith.constant 0 : index
    %c0_5 = arith.constant 0 : index
    %4 = vector.load %arg6[%c0_4, %c0_5] : memref<64x16xbf16, #tpu.memory_space<vmem>>, vector<64x16xbf16>
    %c0_6 = arith.constant 0 : index
    %c0_7 = arith.constant 0 : index
    %c0_8 = arith.constant 0 : index
    %5 = vector.load %arg2[%c0_6, %c0_7, %c0_8] : memref<1x16x256xbf16, #tpu.memory_space<vmem>>, vector<1x16x256xbf16>
    %6 = vector.shape_cast %5 : vector<1x16x256xbf16> to vector<16x256xbf16>
    %cst_9 = arith.constant dense<0.000000e+00> : vector<64x256xf32>
    %7 = tpu.matmul %4, %6, %cst_9 {dimension_numbers = #tpu.dot_dimension_numbers<[1], [0], [0], [1], [0, 0, 1, 1], [], []>} : vector<64x16xbf16>, vector<16x256xbf16>, vector<64x256xf32> -> vector<64x256xf32>
    %8 = arith.addf %3, %7 : vector<64x256xf32>
    %c0_10 = arith.constant 0 : index
    %c0_11 = arith.constant 0 : index
    %9 = vector.load %arg7[%c0_10, %c0_11] : memref<64x16xbf16, #tpu.memory_space<vmem>>, vector<64x16xbf16>
    %c0_12 = arith.constant 0 : index
    %c0_13 = arith.constant 0 : index
    %c0_14 = arith.constant 0 : index
    %10 = vector.load %arg3[%c0_12, %c0_13, %c0_14] : memref<1x16x256xbf16, #tpu.memory_space<vmem>>, vector<1x16x256xbf16>
    %11 = vector.shape_cast %10 : vector<1x16x256xbf16> to vector<16x256xbf16>
    %cst_15 = arith.constant dense<0.000000e+00> : vector<64x256xf32>
    %12 = tpu.matmul %9, %11, %cst_15 {dimension_numbers = #tpu.dot_dimension_numbers<[1], [0], [0], [1], [0, 0, 1, 1], [], []>} : vector<64x16xbf16>, vector<16x256xbf16>, vector<64x256xf32> -> vector<64x256xf32>
    %13 = arith.addf %8, %12 : vector<64x256xf32>
    %c0_16 = arith.constant 0 : index
    %c0_17 = arith.constant 0 : index
    %14 = vector.load %arg8[%c0_16, %c0_17] : memref<64x16xbf16, #tpu.memory_space<vmem>>, vector<64x16xbf16>
    %c0_18 = arith.constant 0 : index
    %c0_19 = arith.constant 0 : index
    %c0_20 = arith.constant 0 : index
    %15 = vector.load %arg4[%c0_18, %c0_19, %c0_20] : memref<1x16x256xbf16, #tpu.memory_space<vmem>>, vector<1x16x256xbf16>
    %16 = vector.shape_cast %15 : vector<1x16x256xbf16> to vector<16x256xbf16>
    %cst_21 = arith.constant dense<0.000000e+00> : vector<64x256xf32>
    %17 = tpu.matmul %14, %16, %cst_21 {dimension_numbers = #tpu.dot_dimension_numbers<[1], [0], [0], [1], [0, 0, 1, 1], [], []>} : vector<64x16xbf16>, vector<16x256xbf16>, vector<64x256xf32> -> vector<64x256xf32>
    %18 = arith.addf %13, %17 : vector<64x256xf32>
    %c0_22 = arith.constant 0 : index
    %c0_23 = arith.constant 0 : index
    %19 = vector.load %arg9[%c0_22, %c0_23] : memref<64x1xf32, #tpu.memory_space<vmem>>, vector<64x1xf32>
    %20 = vector.broadcast %19 : vector<64x1xf32> to vector<64x256xf32>
    %21 = arith.addf %18, %20 : vector<64x256xf32>
    %cst_24 = arith.constant 0.000000e+00 : f32
    %22 = vector.broadcast %cst_24 : f32 to vector<64x256xf32>
    %23 = arith.maximumf %21, %22 : vector<64x256xf32>
    %24 = arith.truncf %23 : vector<64x256xf32> to vector<64x256xbf16>
    %c0_25 = arith.constant 0 : index
    %c0_26 = arith.constant 0 : index
    %25 = vector.load %arg10[%c0_25, %c0_26] : memref<80x64xbf16, #tpu.memory_space<vmem>>, vector<80x64xbf16>
    %cst_27 = arith.constant dense<0.000000e+00> : vector<80x256xf32>
    %26 = tpu.matmul %25, %24, %cst_27 {dimension_numbers = #tpu.dot_dimension_numbers<[1], [0], [0], [1], [0, 0, 1, 1], [], []>} : vector<80x64xbf16>, vector<64x256xbf16>, vector<80x256xf32> -> vector<80x256xf32>
    %c0_28 = arith.constant 0 : index
    %c0_29 = arith.constant 0 : index
    %27 = vector.load %arg11[%c0_28, %c0_29] : memref<80x1xf32, #tpu.memory_space<vmem>>, vector<80x1xf32>
    %28 = vector.broadcast %27 : vector<80x1xf32> to vector<80x256xf32>
    %29 = arith.addf %26, %28 : vector<80x256xf32>
    %30 = vector.extract_strided_slice %29 {offsets = [0, 0], sizes = [8, 256], strides = [1, 1]} : vector<80x256xf32> to vector<8x256xf32>
    %31 = vector.extract_strided_slice %29 {offsets = [8, 0], sizes = [8, 256], strides = [1, 1]} : vector<80x256xf32> to vector<8x256xf32>
    %32 = vector.extract_strided_slice %29 {offsets = [16, 0], sizes = [64, 256], strides = [1, 1]} : vector<80x256xf32> to vector<64x256xf32>
    %33 = arith.mulf %30, %30 : vector<8x256xf32>
    %cst_30 = arith.constant dense<0.000000e+00> : vector<256xf32>
    %34 = vector.multi_reduction <add>, %33, %cst_30 [0] : vector<8x256xf32> to vector<256xf32>
    %35 = vector.shape_cast %34 : vector<256xf32> to vector<1x256xf32>
    %36 = math.rsqrt %35 : vector<1x256xf32>
    %37 = vector.broadcast %36 : vector<1x256xf32> to vector<8x256xf32>
    %38 = arith.mulf %30, %37 : vector<8x256xf32>
    %39 = arith.mulf %31, %31 : vector<8x256xf32>
    %cst_31 = arith.constant dense<0.000000e+00> : vector<256xf32>
    %40 = vector.multi_reduction <add>, %39, %cst_31 [0] : vector<8x256xf32> to vector<256xf32>
    %41 = vector.shape_cast %40 : vector<256xf32> to vector<1x256xf32>
    %42 = math.rsqrt %41 : vector<1x256xf32>
    %43 = vector.broadcast %42 : vector<1x256xf32> to vector<8x256xf32>
    %44 = arith.mulf %31, %43 : vector<8x256xf32>
    %cst_32 = arith.constant dense<0.000000e+00> : vector<8xf32>
    %45 = vector.multi_reduction <add>, %44, %cst_32 [1] : vector<8x256xf32> to vector<8xf32>
    %46 = vector.shape_cast %45 : vector<8xf32> to vector<8x1xf32>
    %cst_33 = arith.constant 9.99999997E-7 : f32
    %47 = vector.broadcast %cst_33 : f32 to vector<8x1xf32>
    %48 = arith.addf %46, %47 : vector<8x1xf32>
    %49 = vector.broadcast %48 : vector<8x1xf32> to vector<8x256xf32>
    %50 = arith.mulf %38, %49 : vector<8x256xf32>
    %cst_34 = arith.constant dense<0.000000e+00> : vector<256xf32>
    %51 = vector.multi_reduction <add>, %50, %cst_34 [0] : vector<8x256xf32> to vector<256xf32>
    %52 = vector.shape_cast %51 : vector<256xf32> to vector<1x256xf32>
    %cst_35 = arith.constant 2.560000e+02 : f32
    %53 = vector.broadcast %cst_35 : f32 to vector<1x256xf32>
    %54 = arith.addf %53, %52 : vector<1x256xf32>
    %55 = tpu.reciprocal %54 {approx = true} : vector<1x256xf32> -> vector<1x256xf32>
    %cst_36 = arith.constant dense<0.000000e+00> : vector<64xf32>
    %56 = vector.multi_reduction <add>, %32, %cst_36 [1] : vector<64x256xf32> to vector<64xf32>
    %57 = vector.shape_cast %56 : vector<64xf32> to vector<64x1xf32>
    %58 = arith.truncf %38 : vector<8x256xf32> to vector<8x256xbf16>
    %59 = arith.truncf %44 : vector<8x256xf32> to vector<8x256xbf16>
    %60 = arith.truncf %32 : vector<64x256xf32> to vector<64x256xbf16>
    %cst_37 = arith.constant dense<0.000000e+00> : vector<64x8xf32>
    %61 = tpu.matmul %60, %59, %cst_37 {dimension_numbers = #tpu.dot_dimension_numbers<[1], [1], [0], [0], [0, 0, 1, 0], [], []>} : vector<64x256xbf16>, vector<8x256xbf16>, vector<64x8xf32> -> vector<64x8xf32>
    %62 = arith.truncf %61 : vector<64x8xf32> to vector<64x8xbf16>
    %cst_38 = arith.constant dense<0.000000e+00> : vector<64x256xf32>
    %63 = tpu.matmul %62, %58, %cst_38 {dimension_numbers = #tpu.dot_dimension_numbers<[1], [0], [0], [1], [0, 0, 1, 1], [], []>} : vector<64x8xbf16>, vector<8x256xbf16>, vector<64x256xf32> -> vector<64x256xf32>
    %64 = vector.broadcast %57 : vector<64x1xf32> to vector<64x256xf32>
    %65 = arith.addf %64, %63 : vector<64x256xf32>
    %66 = vector.broadcast %55 : vector<1x256xf32> to vector<64x256xf32>
    %67 = arith.mulf %65, %66 : vector<64x256xf32>
    %68 = arith.addf %67, %23 : vector<64x256xf32>
    %c0_39 = arith.constant 0 : index
    %c0_40 = arith.constant 0 : index
    %c0_41 = arith.constant 0 : index
    %69 = vector.load %arg12[%c0_39, %c0_40, %c0_41] : memref<1x64x256xf32, #tpu.memory_space<vmem>>, vector<1x64x256xf32>
    %70 = vector.shape_cast %69 : vector<1x64x256xf32> to vector<64x256xf32>
    %71 = vector.shape_cast %68 : vector<64x256xf32> to vector<1x64x256xf32>
    tpu.vector_store %arg12[%c0_39, %c0_40, %c0_41], %71 {strides = array<i32>} : memref<1x64x256xf32, #tpu.memory_space<vmem>>, vector<1x64x256xf32>,
    return
  }
  func.func @transform_0(%arg0: i32) -> (i32, i32, i32) {
    %c0_i32 = arith.constant 0 : i32
    %c0_i32_0 = arith.constant 0 : i32
    %c0_i32_1 = arith.constant 0 : i32
    return %arg0, %c0_i32, %c0_i32_0 : i32, i32, i32
  }
  func.func @transform_1(%arg0: i32) -> (i32, i32, i32) {
    %c0_i32 = arith.constant 0 : i32
    %c0_i32_0 = arith.constant 0 : i32
    %c0_i32_1 = arith.constant 0 : i32
    return %arg0, %c0_i32, %c0_i32_0 : i32, i32, i32
  }
  func.func @transform_2(%arg0: i32) -> (i32, i32, i32) {
    %c0_i32 = arith.constant 0 : i32
    %c0_i32_0 = arith.constant 0 : i32
    %c0_i32_1 = arith.constant 0 : i32
    return %arg0, %c0_i32, %c0_i32_0 : i32, i32, i32
  }
  func.func @transform_3(%arg0: i32) -> (i32, i32, i32) {
    %c0_i32 = arith.constant 0 : i32
    %c0_i32_0 = arith.constant 0 : i32
    %c0_i32_1 = arith.constant 0 : i32
    return %arg0, %c0_i32, %c0_i32_0 : i32, i32, i32
  }
  func.func @transform_4(%arg0: i32) -> (i32, i32) {
    %c0_i32 = arith.constant 0 : i32
    %c0_i32_0 = arith.constant 0 : i32
    %c0_i32_1 = arith.constant 0 : i32
    return %c0_i32, %c0_i32_0 : i32, i32
  }
  func.func @transform_5(%arg0: i32) -> (i32, i32) {
    %c0_i32 = arith.constant 0 : i32
    %c0_i32_0 = arith.constant 0 : i32
    %c0_i32_1 = arith.constant 0 : i32
    return %c0_i32, %c0_i32_0 : i32, i32
  }
  func.func @transform_6(%arg0: i32) -> (i32, i32) {
    %c0_i32 = arith.constant 0 : i32
    %c0_i32_0 = arith.constant 0 : i32
    %c0_i32_1 = arith.constant 0 : i32
    return %c0_i32, %c0_i32_0 : i32, i32
  }
  func.func @transform_7(%arg0: i32) -> (i32, i32) {
    %c0_i32 = arith.constant 0 : i32
    %c0_i32_0 = arith.constant 0 : i32
    %c0_i32_1 = arith.constant 0 : i32
    return %c0_i32, %c0_i32_0 : i32, i32
  }
  func.func @transform_8(%arg0: i32) -> (i32, i32) {
    %c0_i32 = arith.constant 0 : i32
    %c0_i32_0 = arith.constant 0 : i32
    %c0_i32_1 = arith.constant 0 : i32
    return %c0_i32, %c0_i32_0 : i32, i32
  }
  func.func @transform_9(%arg0: i32) -> (i32, i32) {
    %c0_i32 = arith.constant 0 : i32
    %c0_i32_0 = arith.constant 0 : i32
    %c0_i32_1 = arith.constant 0 : i32
    return %c0_i32, %c0_i32_0 : i32, i32
  }
  func.func @transform_10(%arg0: i32) -> (i32, i32) {
    %c0_i32 = arith.constant 0 : i32
    %c0_i32_0 = arith.constant 0 : i32
    %c0_i32_1 = arith.constant 0 : i32
    return %c0_i32, %c0_i32_0 : i32, i32
  }
  func.func @transform_11(%arg0: i32) -> (i32, i32, i32) {
    %c0_i32 = arith.constant 0 : i32
    %c0_i32_0 = arith.constant 0 : i32
    %c0_i32_1 = arith.constant 0 : i32
    return %arg0, %c0_i32, %c0_i32_0 : i32, i32, i32
  }
}

</mosaic_0001>

<llo_original>
// kernel: _lambda_.1
$region0: #{_lambda_.1}
  #allocation0 [shape = 'u32[]', space=smem, size = 0x4, offset = 0x4, fixed_abs, tag = 'smem constant byte address 0x4 - core index']
  #allocation1 [shape = 'u32[72,128]{1,0:T(1,128)}', space=vmem, size = 0x9000, scoped, tag = 'internal scratch']
  %s0 = inlined_call_operand.vmem [shape: bf16[2,16,256], index: 0, kind: input, shape index: {}]
  %s1 = inlined_call_operand.vmem [shape: bf16[2,16,256], index: 1, kind: input, shape index: {}]
  %s2 = inlined_call_operand.vmem [shape: bf16[2,16,256], index: 2, kind: input, shape index: {}]
  %s3 = inlined_call_operand.vmem [shape: bf16[2,16,256], index: 3, kind: input, shape index: {}]
  %s4 = inlined_call_operand.vmem [shape: bf16[64,16], index: 4, kind: input, shape index: {}]
  %s5 = inlined_call_operand.vmem [shape: bf16[64,16], index: 5, kind: input, shape index: {}]
  %s6 = inlined_call_operand.vmem [shape: bf16[64,16], index: 6, kind: input, shape index: {}]
  %s7 = inlined_call_operand.vmem [shape: bf16[64,16], index: 7, kind: input, shape index: {}]
  %s8 = inlined_call_operand.vmem [shape: f32[64,1], index: 8, kind: input, shape index: {}]
  %s9 = inlined_call_operand.vmem [shape: bf16[80,64], index: 9, kind: input, shape index: {}]
  %s10 = inlined_call_operand.vmem [shape: f32[80,1], index: 10, kind: input, shape index: {}]
  %s11 = inlined_call_operand.vmem [shape: f32[2,64,256], index: 11, kind: output, shape index: {}]
  %s12 = sld [smem:[#allocation0]]
  $region77: #{_lambda_.1} parent=0
    _
  %s14 = ssub.s32 1, %s12
  %s15 = scalar_select 0, %s14, %s12
  loop: start=0, step=1, limit=4
  $region2: #{_lambda_.1} parent=0 // loop_pre_header
    _
  $region3: #{_lambda_.1} parent=0 // loop_header
    %s17 = sphi 0, %s21
    %p18 = scmp.ge.s32.totalorder %s17, 4
    %s27 = sphi 0, %s29
    %s30 = sphi 0, %s27
    %s31 = sphi 0, %s30
    %s47 = sphi 0, %s31
    %s53 = sphi 0, %s55
    %s56 = sphi 0, %s53
    %s57 = sphi 0, %s56
    %s73 = sphi 0, %s57
    %s79 = sphi 0, %s81
    %s82 = sphi 0, %s79
    %s83 = sphi 0, %s82
    %s99 = sphi 0, %s83
    %s105 = sphi 0, %s107
    %s108 = sphi 0, %s105
    %s109 = sphi 0, %s108
    %s125 = sphi 0, %s109
    %s129 = sphi 0, %s129
    %s131 = sphi 0, %s129
    %s132 = sphi 0, %s131
    %s146 = sphi 0, %s132
    %s150 = sphi 0, %s150
    %s152 = sphi 0, %s150
    %s153 = sphi 0, %s152
    %s167 = sphi 0, %s153
    %s171 = sphi 0, %s171
    %s173 = sphi 0, %s171
    %s174 = sphi 0, %s173
    %s188 = sphi 0, %s174
    %s192 = sphi 0, %s192
    %s194 = sphi 0, %s192
    %s195 = sphi 0, %s194
    %s209 = sphi 0, %s195
    %s213 = sphi 0, %s213
    %s215 = sphi 0, %s213
    %s216 = sphi 0, %s215
    %s230 = sphi 0, %s216
    %s234 = sphi 0, %s234
    %s236 = sphi 0, %s234
    %s237 = sphi 0, %s236
    %s251 = sphi 0, %s237
    %s255 = sphi 0, %s255
    %s257 = sphi 0, %s255
    %s258 = sphi 0, %s257
    %s272 = sphi 0, %s258
    %s278 = sphi 0, %s280
    %s281 = sphi 0, %s278
    %s282 = sphi 0, %s281
    %s298 = sphi 0, %s282
  $region4: #{_lambda_.1} parent=0 // loop_header_branch
    %20 = sbr.rel (%p18) target = $region8
  $region5: #{_lambda_.1} parent=0 // loop_body
    %s22 = ssub.s32 %s17, 1
    %s23 = ssub.s32 %s17, 2
    %s24 = sadd.s32 %s17, 1
    %s25 = ssub.s32 %s17, %s24
    %p26 = scmp.eq.s32.totalorder %s25, 0
    %s28 = sadd.s32 %s27, 1
    %s29 = scalar_select %p26, %s27, %s28
    %p32 = pneg %p26
    %p33 = scmp.eq.s32.totalorder %s17, 1
    %p34 = por %p32, %p33
    %p35 = scmp.ne.s32.totalorder %s27, %s30
    %p36 = scmp.eq.s32.totalorder %s17, 0
    %p37 = por %p35, %p36
    %p38 = scmp.ne.s32.totalorder %s27, %s30
    %p39 = scmp.eq.s32.totalorder %s22, 1
    %p40 = por %p38, %p39
    %p41 = scmp.ne.s32.totalorder %s30, %s31
    %p42 = scmp.eq.s32.totalorder %s22, 0
    %p43 = por %p41, %p42
    %p44 = scmp.ne.s32.totalorder %s30, %s31
    %p45 = scmp.eq.s32.totalorder %s23, 1
    %p46 = por %p44, %p45
    %p48 = scmp.ne.s32.totalorder %s31, %s47
    %p49 = scmp.eq.s32.totalorder %s23, 0
    %p50 = por %p48, %p49
    %s51 = ssub.s32 %s17, %s24
    %p52 = scmp.eq.s32.totalorder %s51, 0
    %s54 = sadd.s32 %s53, 1
    %s55 = scalar_select %p52, %s53, %s54
    %p58 = pneg %p52
    %p59 = scmp.eq.s32.totalorder %s17, 1
    %p60 = por %p58, %p59
    %p61 = scmp.ne.s32.totalorder %s53, %s56
    %p62 = scmp.eq.s32.totalorder %s17, 0
    %p63 = por %p61, %p62
    %p64 = scmp.ne.s32.totalorder %s53, %s56
    %p65 = scmp.eq.s32.totalorder %s22, 1
    %p66 = por %p64, %p65
    %p67 = scmp.ne.s32.totalorder %s56, %s57
    %p68 = scmp.eq.s32.totalorder %s22, 0
    %p69 = por %p67, %p68
    %p70 = scmp.ne.s32.totalorder %s56, %s57
    %p71 = scmp.eq.s32.totalorder %s23, 1
    %p72 = por %p70, %p71
    %p74 = scmp.ne.s32.totalorder %s57, %s73
    %p75 = scmp.eq.s32.totalorder %s23, 0
    %p76 = por %p74, %p75
    %s77 = ssub.s32 %s17, %s24
    %p78 = scmp.eq.s32.totalorder %s77, 0
    %s80 = sadd.s32 %s79, 1
    %s81 = scalar_select %p78, %s79, %s80
    %p84 = pneg %p78
    %p85 = scmp.eq.s32.totalorder %s17, 1
    %p86 = por %p84, %p85
    %p87 = scmp.ne.s32.totalorder %s79, %s82
    %p88 = scmp.eq.s32.totalorder %s17, 0
    %p89 = por %p87, %p88
    %p90 = scmp.ne.s32.totalorder %s79, %s82
    %p91 = scmp.eq.s32.totalorder %s22, 1
    %p92 = por %p90, %p91
    %p93 = scmp.ne.s32.totalorder %s82, %s83
    %p94 = scmp.eq.s32.totalorder %s22, 0
    %p95 = por %p93, %p94
    %p96 = scmp.ne.s32.totalorder %s82, %s83
    %p97 = scmp.eq.s32.totalorder %s23, 1
    %p98 = por %p96, %p97
    %p100 = scmp.ne.s32.totalorder %s83, %s99
    %p101 = scmp.eq.s32.totalorder %s23, 0
    %p102 = por %p100, %p101
    %s103 = ssub.s32 %s17, %s24
    %p104 = scmp.eq.s32.totalorder %s103, 0
    %s106 = sadd.s32 %s105, 1
    %s107 = scalar_select %p104, %s105, %s106
    %p110 = pneg %p104
    %p111 = scmp.eq.s32.totalorder %s17, 1
    %p112 = por %p110, %p111
    %p113 = scmp.ne.s32.totalorder %s105, %s108
    %p114 = scmp.eq.s32.totalorder %s17, 0
    %p115 = por %p113, %p114
    %p116 = scmp.ne.s32.totalorder %s105, %s108
    %p117 = scmp.eq.s32.totalorder %s22, 1
    %p118 = por %p116, %p117
    %p119 = scmp.ne.s32.totalorder %s108, %s109
    %p120 = scmp.eq.s32.totalorder %s22, 0
    %p121 = por %p119, %p120
    %p122 = scmp.ne.s32.totalorder %s108, %s109
    %p123 = scmp.eq.s32.totalorder %s23, 1
    %p124 = por %p122, %p123
    %p126 = scmp.ne.s32.totalorder %s109, %s125
    %p127 = scmp.eq.s32.totalorder %s23, 0
    %p128 = por %p126, %p127
    %s130 = sadd.s32 %s129, 1
    %p133 = scmp.eq.s32.totalorder %s17, 1
    %p134 = scmp.ne.s32.totalorder %s129, %s131
    %p135 = scmp.eq.s32.totalorder %s17, 0
    %p136 = por %p134, %p135
    %p137 = scmp.ne.s32.totalorder %s129, %s131
    %p138 = scmp.eq.s32.totalorder %s22, 1
    %p139 = por %p137, %p138
    %p140 = scmp.ne.s32.totalorder %s131, %s132
    %p141 = scmp.eq.s32.totalorder %s22, 0
    %p142 = por %p140, %p141
    %p143 = scmp.ne.s32.totalorder %s131, %s132
    %p144 = scmp.eq.s32.totalorder %s23, 1
    %p145 = por %p143, %p144
    %p147 = scmp.ne.s32.totalorder %s132, %s146
    %p148 = scmp.eq.s32.totalorder %s23, 0
    %p149 = por %p147, %p148
    %s151 = sadd.s32 %s150, 1
    %p154 = scmp.eq.s32.totalorder %s17, 1
    %p155 = scmp.ne.s32.totalorder %s150, %s152
    %p156 = scmp.eq.s32.totalorder %s17, 0
    %p157 = por %p155, %p156
    %p158 = scmp.ne.s32.totalorder %s150, %s152
    %p159 = scmp.eq.s32.totalorder %s22, 1
    %p160 = por %p158, %p159
    %p161 = scmp.ne.s32.totalorder %s152, %s153
    %p162 = scmp.eq.s32.totalorder %s22, 0
    %p163 = por %p161, %p162
    %p164 = scmp.ne.s32.totalorder %s152, %s153
    %p165 = scmp.eq.s32.totalorder %s23, 1
    %p166 = por %p164, %p165
    %p168 = scmp.ne.s32.totalorder %s153, %s167
    %p169 = scmp.eq.s32.totalorder %s23, 0
    %p170 = por %p168, %p169
    %s172 = sadd.s32 %s171, 1
    %p175 = scmp.eq.s32.totalorder %s17, 1
    %p176 = scmp.ne.s32.totalorder %s171, %s173
    %p177 = scmp.eq.s32.totalorder %s17, 0
    %p178 = por %p176, %p177
    %p179 = scmp.ne.s32.totalorder %s171, %s173
    %p180 = scmp.eq.s32.totalorder %s22, 1
    %p181 = por %p179, %p180
    %p182 = scmp.ne.s32.totalorder %s173, %s174
    %p183 = scmp.eq.s32.totalorder %s22, 0
    %p184 = por %p182, %p183
    %p185 = scmp.ne.s32.totalorder %s173, %s174
    %p186 = scmp.eq.s32.totalorder %s23, 1
    %p187 = por %p185, %p186
    %p189 = scmp.ne.s32.totalorder %s174, %s188
    %p190 = scmp.eq.s32.totalorder %s23, 0
    %p191 = por %p189, %p190
    %s193 = sadd.s32 %s192, 1
    %p196 = scmp.eq.s32.totalorder %s17, 1
    %p197 = scmp.ne.s32.totalorder %s192, %s194
    %p198 = scmp.eq.s32.totalorder %s17, 0
    %p199 = por %p197, %p198
    %p200 = scmp.ne.s32.totalorder %s192, %s194
    %p201 = scmp.eq.s32.totalorder %s22, 1
    %p202 = por %p200, %p201
    %p203 = scmp.ne.s32.totalorder %s194, %s195
    %p204 = scmp.eq.s32.totalorder %s22, 0
    %p205 = por %p203, %p204
    %p206 = scmp.ne.s32.totalorder %s194, %s195
    %p207 = scmp.eq.s32.totalorder %s23, 1
    %p208 = por %p206, %p207
    %p210 = scmp.ne.s32.totalorder %s195, %s209
    %p211 = scmp.eq.s32.totalorder %s23, 0
    %p212 = por %p210, %p211
    %s214 = sadd.s32 %s213, 1
    %p217 = scmp.eq.s32.totalorder %s17, 1
    %p218 = scmp.ne.s32.totalorder %s213, %s215
    %p219 = scmp.eq.s32.totalorder %s17, 0
    %p220 = por %p218, %p219
    %p221 = scmp.ne.s32.totalorder %s213, %s215
    %p222 = scmp.eq.s32.totalorder %s22, 1
    %p223 = por %p221, %p222
    %p224 = scmp.ne.s32.totalorder %s215, %s216
    %p225 = scmp.eq.s32.totalorder %s22, 0
    %p226 = por %p224, %p225
    %p227 = scmp.ne.s32.totalorder %s215, %s216
    %p228 = scmp.eq.s32.totalorder %s23, 1
    %p229 = por %p227, %p228
    %p231 = scmp.ne.s32.totalorder %s216, %s230
    %p232 = scmp.eq.s32.totalorder %s23, 0
    %p233 = por %p231, %p232
    %s235 = sadd.s32 %s234, 1
    %p238 = scmp.eq.s32.totalorder %s17, 1
    %p239 = scmp.ne.s32.totalorder %s234, %s236
    %p240 = scmp.eq.s32.totalorder %s17, 0
    %p241 = por %p239, %p240
    %p242 = scmp.ne.s32.totalorder %s234, %s236
    %p243 = scmp.eq.s32.totalorder %s22, 1
    %p244 = por %p242, %p243
    %p245 = scmp.ne.s32.totalorder %s236, %s237
    %p246 = scmp.eq.s32.totalorder %s22, 0
    %p247 = por %p245, %p246
    %p248 = scmp.ne.s32.totalorder %s236, %s237
    %p249 = scmp.eq.s32.totalorder %s23, 1
    %p250 = por %p248, %p249
    %p252 = scmp.ne.s32.totalorder %s237, %s251
    %p253 = scmp.eq.s32.totalorder %s23, 0
    %p254 = por %p252, %p253
    %s256 = sadd.s32 %s255, 1
    %p259 = scmp.eq.s32.totalorder %s17, 1
    %p260 = scmp.ne.s32.totalorder %s255, %s257
    %p261 = scmp.eq.s32.totalorder %s17, 0
    %p262 = por %p260, %p261
    %p263 = scmp.ne.s32.totalorder %s255, %s257
    %p264 = scmp.eq.s32.totalorder %s22, 1
    %p265 = por %p263, %p264
    %p266 = scmp.ne.s32.totalorder %s257, %s258
    %p267 = scmp.eq.s32.totalorder %s22, 0
    %p268 = por %p266, %p267
    %p269 = scmp.ne.s32.totalorder %s257, %s258
    %p270 = scmp.eq.s32.totalorder %s23, 1
    %p271 = por %p269, %p270
    %p273 = scmp.ne.s32.totalorder %s258, %s272
    %p274 = scmp.eq.s32.totalorder %s23, 0
    %p275 = por %p273, %p274
    %s276 = ssub.s32 %s17, %s24
    %p277 = scmp.eq.s32.totalorder %s276, 0
    %s279 = sadd.s32 %s278, 1
    %s280 = scalar_select %p277, %s278, %s279
    %p283 = pneg %p277
    %p284 = scmp.eq.s32.totalorder %s17, 1
    %p285 = por %p283, %p284
    %p286 = scmp.ne.s32.totalorder %s278, %s281
    %p287 = scmp.eq.s32.totalorder %s17, 0
    %p288 = por %p286, %p287
    %p289 = scmp.ne.s32.totalorder %s278, %s281
    %p290 = scmp.eq.s32.totalorder %s22, 1
    %p291 = por %p289, %p290
    %p292 = scmp.ne.s32.totalorder %s281, %s282
    %p293 = scmp.eq.s32.totalorder %s22, 0
    %p294 = por %p292, %p293
    %p295 = scmp.ne.s32.totalorder %s281, %s282
    %p296 = scmp.eq.s32.totalorder %s23, 1
    %p297 = por %p295, %p296
    %p299 = scmp.ne.s32.totalorder %s282, %s298
    %p300 = scmp.eq.s32.totalorder %s23, 0
    %p301 = por %p299, %p300
    %p302 = scmp.le.s32.totalorder 1, %s17
    %p303 = scmp.lt.s32.totalorder %s17, 3
    %p304 = pnand %p302, %p303
    %p305 = pneg %p304
    // Predicated region
    $region9: #{_lambda_.1} parent=5 // pred_check
      _
    $region10: #{_lambda_.1} parent=5 // pred_check_branch
      %307 = sbr.rel (%p304) target = $region12
    $region11: #{_lambda_.1} parent=5 // pred_region
      %s308 = ssub.s32 %s17, 1
      // Predicated region
      $region13: #{_lambda_.1} parent=11 // pred_check
        %p309 = pneg %p142
      $region14: #{_lambda_.1} parent=11 // pred_check_branch
        %311 = sbr.rel (%p309) target = $region16
      $region15: #{_lambda_.1} parent=11 // pred_region
        _
      $region16: #{_lambda_.1} parent=11 // pred_fallthru
        _
      // Predicated region
      $region17: #{_lambda_.1} parent=11 // pred_check
        %p312 = pneg %p163
      $region18: #{_lambda_.1} parent=11 // pred_check_branch
        %314 = sbr.rel (%p312) target = $region20
      $region19: #{_lambda_.1} parent=11 // pred_region
        _
      $region20: #{_lambda_.1} parent=11 // pred_fallthru
        _
      // Predicated region
      $region21: #{_lambda_.1} parent=11 // pred_check
        %p315 = pneg %p184
      $region22: #{_lambda_.1} parent=11 // pred_check_branch
        %317 = sbr.rel (%p315) target = $region24
      $region23: #{_lambda_.1} parent=11 // pred_region
        _
      $region24: #{_lambda_.1} parent=11 // pred_fallthru
        _
      // Predicated region
      $region25: #{_lambda_.1} parent=11 // pred_check
        %p318 = pneg %p205
      $region26: #{_lambda_.1} parent=11 // pred_check_branch
        %320 = sbr.rel (%p318) target = $region28
      $region27: #{_lambda_.1} parent=11 // pred_region
        _
      $region28: #{_lambda_.1} parent=11 // pred_fallthru
        _
      // Predicated region
      $region29: #{_lambda_.1} parent=11 // pred_check
        %p321 = pneg %p226
      $region30: #{_lambda_.1} parent=11 // pred_check_branch
        %323 = sbr.rel (%p321) target = $region32
      $region31: #{_lambda_.1} parent=11 // pred_region
        _
      $region32: #{_lambda_.1} parent=11 // pred_fallthru
        _
      // Predicated region
      $region33: #{_lambda_.1} parent=11 // pred_check
        %p324 = pneg %p247
      $region34: #{_lambda_.1} parent=11 // pred_check_branch
        %326 = sbr.rel (%p324) target = $region36
      $region35: #{_lambda_.1} parent=11 // pred_region
        _
      $region36: #{_lambda_.1} parent=11 // pred_fallthru
        _
      // Predicated region
      $region37: #{_lambda_.1} parent=11 // pred_check
        %p327 = pneg %p268
      $region38: #{_lambda_.1} parent=11 // pred_check_branch
        %329 = sbr.rel (%p327) target = $region40
      $region39: #{_lambda_.1} parent=11 // pred_region
        _
      $region40: #{_lambda_.1} parent=11 // pred_fallthru
        _
    $region12: #{_lambda_.1} parent=5 // pred_fallthru
      _
    %p330 = scmp.lt.s32.totalorder %s17, 2
    // Predicated region
    $region41: #{_lambda_.1} parent=5 // pred_check
      %p331 = pneg %p330
    $region42: #{_lambda_.1} parent=5 // pred_check_branch
      %333 = sbr.rel (%p331) target = $region44
    $region43: #{_lambda_.1} parent=5 // pred_region
      // Predicated region
      $region45: #{_lambda_.1} parent=43 // pred_check
        %p334 = pneg %p37
      $region46: #{_lambda_.1} parent=43 // pred_check_branch
        %336 = sbr.rel (%p334) target = $region48
      $region47: #{_lambda_.1} parent=43 // pred_region
        %p337 = scmp.lt.s32.totalorder %s17, 1
        %s338 = scalar_select %p337, %s17, 1
        %s339 = smul.addr %s338, 4
        %s340 = smul.addr %s339, 4
        %s341 = scalar_lea.vmem %s0, %s340
      $region48: #{_lambda_.1} parent=43 // pred_fallthru
        _
      // Predicated region
      $region49: #{_lambda_.1} parent=43 // pred_check
        %p342 = pneg %p63
      $region50: #{_lambda_.1} parent=43 // pred_check_branch
        %344 = sbr.rel (%p342) target = $region52
      $region51: #{_lambda_.1} parent=43 // pred_region
        %p345 = scmp.lt.s32.totalorder %s17, 1
        %s346 = scalar_select %p345, %s17, 1
        %s347 = smul.addr %s346, 4
        %s348 = smul.addr %s347, 4
        %s349 = scalar_lea.vmem %s1, %s348
      $region52: #{_lambda_.1} parent=43 // pred_fallthru
        _
      // Predicated region
      $region53: #{_lambda_.1} parent=43 // pred_check
        %p350 = pneg %p89
      $region54: #{_lambda_.1} parent=43 // pred_check_branch
        %352 = sbr.rel (%p350) target = $region56
      $region55: #{_lambda_.1} parent=43 // pred_region
        %p353 = scmp.lt.s32.totalorder %s17, 1
        %s354 = scalar_select %p353, %s17, 1
        %s355 = smul.addr %s354, 4
        %s356 = smul.addr %s355, 4
        %s357 = scalar_lea.vmem %s2, %s356
      $region56: #{_lambda_.1} parent=43 // pred_fallthru
        _
      // Predicated region
      $region57: #{_lambda_.1} parent=43 // pred_check
        %p358 = pneg %p115
      $region58: #{_lambda_.1} parent=43 // pred_check_branch
        %360 = sbr.rel (%p358) target = $region60
      $region59: #{_lambda_.1} parent=43 // pred_region
        %p361 = scmp.lt.s32.totalorder %s17, 1
        %s362 = scalar_select %p361, %s17, 1
        %s363 = smul.addr %s362, 4
        %s364 = smul.addr %s363, 4
        %s365 = scalar_lea.vmem %s3, %s364
      $region60: #{_lambda_.1} parent=43 // pred_fallthru
        _
    $region44: #{_lambda_.1} parent=5 // pred_fallthru
      _
    %p366 = scmp.le.s32.totalorder 1, %s17
    %p367 = scmp.lt.s32.totalorder %s17, 3
    %p368 = pnand %p366, %p367
    %p369 = pneg %p368
    // Predicated region
    $region61: #{_lambda_.1} parent=5 // pred_check
      _
    $region62: #{_lambda_.1} parent=5 // pred_check_branch
      %371 = sbr.rel (%p368) target = $region64
    $region63: #{_lambda_.1} parent=5 // pred_region
      %s372 = ssub.s32 %s17, 1
      %p373 = scmp.lt.s32.totalorder %s22, 1
      %s374 = scalar_select %p373, %s22, 1
      %s375 = smul.addr %s374, 4
      %s376 = smul.addr %s375, 4
      %s377 = scalar_lea.vmem %s0, %s376
      %p378 = pneg %p43
      %p379 = pneg %p40
      %p380 = scmp.lt.s32.totalorder %s22, 1
      %s381 = scalar_select %p380, %s22, 1
      %s382 = smul.addr %s381, 4
      %s383 = smul.addr %s382, 4
      %s384 = scalar_lea.vmem %s1, %s383
      %p385 = pneg %p69
      %p386 = pneg %p66
      %p387 = scmp.lt.s32.totalorder %s22, 1
      %s388 = scalar_select %p387, %s22, 1
      %s389 = smul.addr %s388, 4
      %s390 = smul.addr %s389, 4
      %s391 = scalar_lea.vmem %s2, %s390
      %p392 = pneg %p95
      %p393 = pneg %p92
      %p394 = scmp.lt.s32.totalorder %s22, 1
      %s395 = scalar_select %p394, %s22, 1
      %s396 = smul.addr %s395, 4
      %s397 = smul.addr %s396, 4
      %s398 = scalar_lea.vmem %s3, %s397
      %p399 = pneg %p121
      %p400 = pneg %p118
      %p401 = pneg %p142
      %p402 = pneg %p139
      %p403 = pneg %p163
      %p404 = pneg %p160
      %p405 = pneg %p184
      %p406 = pneg %p181
      %p407 = pneg %p205
      %p408 = pneg %p202
      %p409 = pneg %p226
      %p410 = pneg %p223
      %p411 = pneg %p247
      %p412 = pneg %p244
      %p413 = pneg %p268
      %p414 = pneg %p265
      %p415 = pneg %p294
      %p416 = pneg %p291
      %p417 = scmp.lt.s32.totalorder %s22, 1
      %s418 = scalar_select %p417, %s22, 1
      %s419 = smul.addr %s418, 16
      %s420 = smul.addr %s419, 8
      %s421 = scalar_lea.vmem %s11, %s420
      %p422 = scmp.lt.s32.totalorder %s22, 1
      %s423 = scalar_select %p422, %s22, 1
      %s424 = smul.addr %s423, 4
      %s425 = smul.addr %s424, 4
      %s426 = scalar_lea.vmem %s0, %s425
      %p427 = scmp.lt.s32.totalorder %s22, 1
      %s428 = scalar_select %p427, %s22, 1
      %s429 = smul.addr %s428, 4
      %s430 = smul.addr %s429, 4
      %s431 = scalar_lea.vmem %s1, %s430
      %p432 = scmp.lt.s32.totalorder %s22, 1
      %s433 = scalar_select %p432, %s22, 1
      %s434 = smul.addr %s433, 4
      %s435 = smul.addr %s434, 4
      %s436 = scalar_lea.vmem %s2, %s435
      %p437 = scmp.lt.s32.totalorder %s22, 1
      %s438 = scalar_select %p437, %s22, 1
      %s439 = smul.addr %s438, 4
      %s440 = smul.addr %s439, 4
      %s441 = scalar_lea.vmem %s3, %s440
      %p442 = scmp.lt.s32.totalorder %s22, 1
      %s443 = scalar_select %p442, %s22, 1
      %s444 = smul.addr %s443, 16
      %s445 = smul.addr %s444, 8
      %s446 = scalar_lea.vmem %s11, %s445
      %v448 = vld [vmem:[%s4] sm:$0xf]
      %v449 = vld [vmem:[%s4 + $0x4] sm:$0xf]
      %v450 = vld [vmem:[%s4 + $0x8] sm:$0xf]
      %v451 = vld [vmem:[%s4 + $0xc] sm:$0xf]
      %v452 = vld [vmem:[%s4 + $0x10] sm:$0xf]
      %v453 = vld [vmem:[%s4 + $0x14] sm:$0xf]
      %v454 = vld [vmem:[%s4 + $0x18] sm:$0xf]
      %v455 = vld [vmem:[%s4 + $0x1c] sm:$0xf]
      %v456 = vld [vmem:[%s426] sm:$0xff]
      %v457 = vld [vmem:[%s426 + $0x8] sm:$0xff]
      %v458 = vld [vmem:[%s5] sm:$0xf]
      %v459 = vld [vmem:[%s5 + $0x4] sm:$0xf]
      %v460 = vld [vmem:[%s5 + $0x8] sm:$0xf]
      %v461 = vld [vmem:[%s5 + $0xc] sm:$0xf]
      %v462 = vld [vmem:[%s5 + $0x10] sm:$0xf]
      %v463 = vld [vmem:[%s5 + $0x14] sm:$0xf]
      %v464 = vld [vmem:[%s5 + $0x18] sm:$0xf]
      %v465 = vld [vmem:[%s5 + $0x1c] sm:$0xf]
      %v466 = vld [vmem:[%s431] sm:$0xff]
      %v467 = vld [vmem:[%s431 + $0x8] sm:$0xff]
      %v476 = vunpack.c.l.b16 %v458
      %v477 = vunpack.c.l.b16 %v459
      %v478 = vunpack.c.l.b16 %v460
      %v479 = vunpack.c.l.b16 %v461
      %v480 = vunpack.c.l.b16 %v462
      %v481 = vunpack.c.l.b16 %v463
      %v482 = vunpack.c.l.b16 %v464
      %v483 = vunpack.c.l.b16 %v465
      %v484 = vpack.c.b16 %v477, %v476
      %v485 = vpack.c.b16 %v479, %v478
      %v486 = vpack.c.b16 %v481, %v480
      %v487 = vpack.c.b16 %v483, %v482
      %v490 = vunpack.c.l.b16 %v466
      %v491 = vunpack.c.h.b16 %v466
      %v492 = vunpack.c.l.b16 %v467
      %v493 = vunpack.c.h.b16 %v467
      %v494 = vpack.c.b16 %v492, %v490
      %v495 = vpack.c.b16 %v493, %v491
      %vm498 = vcmask 130048
      %v500 = vsel %vm498, %v484, 0
      %v503 = vsel %vm498, %v485, 0
      %v506 = vsel %vm498, %v486, 0
      %v509 = vsel %vm498, %v487, 0
      %511 = vmatpush.bf16.msra.mxu0 0
      %512 = vmatpush.bf16.msra.mxu0 0
      %513 = vmatpush.bf16.msra.mxu0 0
      %514 = vmatpush.bf16.msra.mxu0 0
      %515 = vmatpush.bf16.msra.mxu0 0
      %516 = vmatpush.bf16.msra.mxu0 0
      %517 = vmatpush.bf16.msra.mxu0 0
      %518 = vmatpush.bf16.msra.mxu0 %v494
      %519 = vmatmul.bf16.gmra.mxu0 %v500
      %v520 = vpop.f32.mrf.mxu0
      %v521 = vadd.f32 0.0, %v520
      %v522 = vpop.f32.mrf.mxu0
      %v523 = vadd.f32 0.0, %v522
      %524 = vmatmul.bf16.gmra.mxu0 %v503
      %v525 = vpop.f32.mrf.mxu0
      %v526 = vadd.f32 0.0, %v525
      %v527 = vpop.f32.mrf.mxu0
      %v528 = vadd.f32 0.0, %v527
      %529 = vmatmul.bf16.gmra.mxu0 %v506
      %v530 = vpop.f32.mrf.mxu0
      %v531 = vadd.f32 0.0, %v530
      %v532 = vpop.f32.mrf.mxu0
      %v533 = vadd.f32 0.0, %v532
      %534 = vmatmul.bf16.gmra.mxu0 %v509
      %v535 = vpop.f32.mrf.mxu0
      %v536 = vadd.f32 0.0, %v535
      %v537 = vpop.f32.mrf.mxu0
      %v538 = vadd.f32 0.0, %v537
      %539 = vdwg.mxu0
      %540 = vmatpush.bf16.msra.mxu0 0
      %541 = vmatpush.bf16.msra.mxu0 0
      %542 = vmatpush.bf16.msra.mxu0 0
      %543 = vmatpush.bf16.msra.mxu0 0
      %544 = vmatpush.bf16.msra.mxu0 0
      %545 = vmatpush.bf16.msra.mxu0 0
      %546 = vmatpush.bf16.msra.mxu0 0
      %547 = vmatpush.bf16.msra.mxu0 %v495
      %548 = vmatmul.bf16.gmra.mxu0 %v500
      %v549 = vpop.f32.mrf.mxu0
      %v550 = vadd.f32 0.0, %v549
      %v551 = vpop.f32.mrf.mxu0
      %v552 = vadd.f32 0.0, %v551
      %553 = vmatmul.bf16.gmra.mxu0 %v503
      %v554 = vpop.f32.mrf.mxu0
      %v555 = vadd.f32 0.0, %v554
      %v556 = vpop.f32.mrf.mxu0
      %v557 = vadd.f32 0.0, %v556
      %558 = vmatmul.bf16.gmra.mxu0 %v506
      %v559 = vpop.f32.mrf.mxu0
      %v560 = vadd.f32 0.0, %v559
      %v561 = vpop.f32.mrf.mxu0
      %v562 = vadd.f32 0.0, %v561
      %563 = vmatmul.bf16.gmra.mxu0 %v509
      %v564 = vpop.f32.mrf.mxu0
      %v565 = vadd.f32 0.0, %v564
      %v566 = vpop.f32.mrf.mxu0
      %v567 = vadd.f32 0.0, %v566
      %568 = vdwg.mxu0
      %v577 = vunpack.c.l.b16 %v448
      %v578 = vunpack.c.l.b16 %v449
      %v579 = vunpack.c.l.b16 %v450
      %v580 = vunpack.c.l.b16 %v451
      %v581 = vunpack.c.l.b16 %v452
      %v582 = vunpack.c.l.b16 %v453
      %v583 = vunpack.c.l.b16 %v454
      %v584 = vunpack.c.l.b16 %v455
      %v585 = vpack.c.b16 %v578, %v577
      %v586 = vpack.c.b16 %v580, %v579
      %v587 = vpack.c.b16 %v582, %v581
      %v588 = vpack.c.b16 %v584, %v583
      %v591 = vunpack.c.l.b16 %v456
      %v592 = vunpack.c.h.b16 %v456
      %v593 = vunpack.c.l.b16 %v457
      %v594 = vunpack.c.h.b16 %v457
      %v595 = vpack.c.b16 %v593, %v591
      %v596 = vpack.c.b16 %v594, %v592
      %v600 = vsel %vm498, %v585, 0
      %v603 = vsel %vm498, %v586, 0
      %v606 = vsel %vm498, %v587, 0
      %v609 = vsel %vm498, %v588, 0
      %611 = vmatpush.bf16.msra.mxu0 0
      %612 = vmatpush.bf16.msra.mxu0 0
      %613 = vmatpush.bf16.msra.mxu0 0
      %614 = vmatpush.bf16.msra.mxu0 0
      %615 = vmatpush.bf16.msra.mxu0 0
      %616 = vmatpush.bf16.msra.mxu0 0
      %617 = vmatpush.bf16.msra.mxu0 0
      %618 = vmatpush.bf16.msra.mxu0 %v595
      %619 = vmatmul.bf16.gmra.mxu0 %v600
      %v620 = vpop.f32.mrf.mxu0
      %v621 = vadd.f32 %v521, %v620
      %v622 = vpop.f32.mrf.mxu0
      %v623 = vadd.f32 %v523, %v622
      %624 = vmatmul.bf16.gmra.mxu0 %v603
      %v625 = vpop.f32.mrf.mxu0
      %v626 = vadd.f32 %v526, %v625
      %v627 = vpop.f32.mrf.mxu0
      %v628 = vadd.f32 %v528, %v627
      %629 = vmatmul.bf16.gmra.mxu0 %v606
      %v630 = vpop.f32.mrf.mxu0
      %v631 = vadd.f32 %v531, %v630
      %v632 = vpop.f32.mrf.mxu0
      %v633 = vadd.f32 %v533, %v632
      %634 = vmatmul.bf16.gmra.mxu0 %v609
      %v635 = vpop.f32.mrf.mxu0
      %v636 = vadd.f32 %v536, %v635
      %v637 = vpop.f32.mrf.mxu0
      %v638 = vadd.f32 %v538, %v637
      %639 = vdwg.mxu0
      %640 = vmatpush.bf16.msra.mxu0 0
      %641 = vmatpush.bf16.msra.mxu0 0
      %642 = vmatpush.bf16.msra.mxu0 0
      %643 = vmatpush.bf16.msra.mxu0 0
      %644 = vmatpush.bf16.msra.mxu0 0
      %645 = vmatpush.bf16.msra.mxu0 0
      %646 = vmatpush.bf16.msra.mxu0 0
      %647 = vmatpush.bf16.msra.mxu0 %v596
      %648 = vmatmul.bf16.gmra.mxu0 %v600
      %v649 = vpop.f32.mrf.mxu0
      %v650 = vadd.f32 %v550, %v649
      %v651 = vpop.f32.mrf.mxu0
      %v652 = vadd.f32 %v552, %v651
      %653 = vmatmul.bf16.gmra.mxu0 %v603
      %v654 = vpop.f32.mrf.mxu0
      %v655 = vadd.f32 %v555, %v654
      %v656 = vpop.f32.mrf.mxu0
      %v657 = vadd.f32 %v557, %v656
      %658 = vmatmul.bf16.gmra.mxu0 %v606
      %v659 = vpop.f32.mrf.mxu0
      %v660 = vadd.f32 %v560, %v659
      %v661 = vpop.f32.mrf.mxu0
      %v662 = vadd.f32 %v562, %v661
      %663 = vmatmul.bf16.gmra.mxu0 %v609
      %v664 = vpop.f32.mrf.mxu0
      %v665 = vadd.f32 %v565, %v664
      %v666 = vpop.f32.mrf.mxu0
      %v667 = vadd.f32 %v567, %v666
      %668 = vdwg.mxu0
      %v669 = vld [vmem:[%s6] sm:$0xf]
      %v670 = vld [vmem:[%s6 + $0x4] sm:$0xf]
      %v671 = vld [vmem:[%s6 + $0x8] sm:$0xf]
      %v672 = vld [vmem:[%s6 + $0xc] sm:$0xf]
      %v673 = vld [vmem:[%s6 + $0x10] sm:$0xf]
      %v674 = vld [vmem:[%s6 + $0x14] sm:$0xf]
      %v675 = vld [vmem:[%s6 + $0x18] sm:$0xf]
      %v676 = vld [vmem:[%s6 + $0x1c] sm:$0xf]
      %v677 = vld [vmem:[%s436] sm:$0xff]
      %v678 = vld [vmem:[%s436 + $0x8] sm:$0xff]
      %v687 = vunpack.c.l.b16 %v669
      %v688 = vunpack.c.l.b16 %v670
      %v689 = vunpack.c.l.b16 %v671
      %v690 = vunpack.c.l.b16 %v672
      %v691 = vunpack.c.l.b16 %v673
      %v692 = vunpack.c.l.b16 %v674
      %v693 = vunpack.c.l.b16 %v675
      %v694 = vunpack.c.l.b16 %v676
      %v695 = vpack.c.b16 %v688, %v687
      %v696 = vpack.c.b16 %v690, %v689
      %v697 = vpack.c.b16 %v692, %v691
      %v698 = vpack.c.b16 %v694, %v693
      %v701 = vunpack.c.l.b16 %v677
      %v702 = vunpack.c.h.b16 %v677
      %v703 = vunpack.c.l.b16 %v678
      %v704 = vunpack.c.h.b16 %v678
      %v705 = vpack.c.b16 %v703, %v701
      %v706 = vpack.c.b16 %v704, %v702
      %v710 = vsel %vm498, %v695, 0
      %v713 = vsel %vm498, %v696, 0
      %v716 = vsel %vm498, %v697, 0
      %v719 = vsel %vm498, %v698, 0
      %721 = vmatpush.bf16.msra.mxu0 0
      %722 = vmatpush.bf16.msra.mxu0 0
      %723 = vmatpush.bf16.msra.mxu0 0
      %724 = vmatpush.bf16.msra.mxu0 0
      %725 = vmatpush.bf16.msra.mxu0 0
      %726 = vmatpush.bf16.msra.mxu0 0
      %727 = vmatpush.bf16.msra.mxu0 0
      %728 = vmatpush.bf16.msra.mxu0 %v705
      %729 = vmatmul.bf16.gmra.mxu0 %v710
      %v730 = vpop.f32.mrf.mxu0
      %v731 = vadd.f32 0.0, %v730
      %v732 = vpop.f32.mrf.mxu0
      %v733 = vadd.f32 0.0, %v732
      %734 = vmatmul.bf16.gmra.mxu0 %v713
      %v735 = vpop.f32.mrf.mxu0
      %v736 = vadd.f32 0.0, %v735
      %v737 = vpop.f32.mrf.mxu0
      %v738 = vadd.f32 0.0, %v737
      %739 = vmatmul.bf16.gmra.mxu0 %v716
      %v740 = vpop.f32.mrf.mxu0
      %v741 = vadd.f32 0.0, %v740
      %v742 = vpop.f32.mrf.mxu0
      %v743 = vadd.f32 0.0, %v742
      %744 = vmatmul.bf16.gmra.mxu0 %v719
      %v745 = vpop.f32.mrf.mxu0
      %v746 = vadd.f32 0.0, %v745
      %v747 = vpop.f32.mrf.mxu0
      %v748 = vadd.f32 0.0, %v747
      %749 = vdwg.mxu0
      %750 = vmatpush.bf16.msra.mxu0 0
      %751 = vmatpush.bf16.msra.mxu0 0
      %752 = vmatpush.bf16.msra.mxu0 0
      %753 = vmatpush.bf16.msra.mxu0 0
      %754 = vmatpush.bf16.msra.mxu0 0
      %755 = vmatpush.bf16.msra.mxu0 0
      %756 = vmatpush.bf16.msra.mxu0 0
      %757 = vmatpush.bf16.msra.mxu0 %v706
      %758 = vmatmul.bf16.gmra.mxu0 %v710
      %v759 = vpop.f32.mrf.mxu0
      %v760 = vadd.f32 0.0, %v759
      %v761 = vpop.f32.mrf.mxu0
      %v762 = vadd.f32 0.0, %v761
      %763 = vmatmul.bf16.gmra.mxu0 %v713
      %v764 = vpop.f32.mrf.mxu0
      %v765 = vadd.f32 0.0, %v764
      %v766 = vpop.f32.mrf.mxu0
      %v767 = vadd.f32 0.0, %v766
      %768 = vmatmul.bf16.gmra.mxu0 %v716
      %v769 = vpop.f32.mrf.mxu0
      %v770 = vadd.f32 0.0, %v769
      %v771 = vpop.f32.mrf.mxu0
      %v772 = vadd.f32 0.0, %v771
      %773 = vmatmul.bf16.gmra.mxu0 %v719
      %v774 = vpop.f32.mrf.mxu0
      %v775 = vadd.f32 0.0, %v774
      %v776 = vpop.f32.mrf.mxu0
      %v777 = vadd.f32 0.0, %v776
      %778 = vdwg.mxu0
      %v779 = vadd.f32 %v621, %v731
      %v780 = vadd.f32 %v650, %v760
      %v781 = vadd.f32 %v623, %v733
      %v782 = vadd.f32 %v652, %v762
      %v783 = vadd.f32 %v626, %v736
      %v784 = vadd.f32 %v655, %v765
      %v785 = vadd.f32 %v628, %v738
      %v786 = vadd.f32 %v657, %v767
      %v787 = vadd.f32 %v631, %v741
      %v788 = vadd.f32 %v660, %v770
      %v789 = vadd.f32 %v633, %v743
      %v790 = vadd.f32 %v662, %v772
      %v791 = vadd.f32 %v636, %v746
      %v792 = vadd.f32 %v665, %v775
      %v793 = vadd.f32 %v638, %v748
      %v794 = vadd.f32 %v667, %v777
      %v795 = vld [vmem:[%s7] sm:$0xf]
      %v796 = vld [vmem:[%s7 + $0x4] sm:$0xf]
      %v797 = vld [vmem:[%s7 + $0x8] sm:$0xf]
      %v798 = vld [vmem:[%s7 + $0xc] sm:$0xf]
      %v799 = vld [vmem:[%s7 + $0x10] sm:$0xf]
      %v800 = vld [vmem:[%s7 + $0x14] sm:$0xf]
      %v801 = vld [vmem:[%s7 + $0x18] sm:$0xf]
      %v802 = vld [vmem:[%s7 + $0x1c] sm:$0xf]
      %v803 = vld [vmem:[%s441] sm:$0xff]
      %v804 = vld [vmem:[%s441 + $0x8] sm:$0xff]
      %v813 = vunpack.c.l.b16 %v795
      %v814 = vunpack.c.l.b16 %v796
      %v815 = vunpack.c.l.b16 %v797
      %v816 = vunpack.c.l.b16 %v798
      %v817 = vunpack.c.l.b16 %v799
      %v818 = vunpack.c.l.b16 %v800
      %v819 = vunpack.c.l.b16 %v801
      %v820 = vunpack.c.l.b16 %v802
      %v821 = vpack.c.b16 %v814, %v813
      %v822 = vpack.c.b16 %v816, %v815
      %v823 = vpack.c.b16 %v818, %v817
      %v824 = vpack.c.b16 %v820, %v819
      %v827 = vunpack.c.l.b16 %v803
      %v828 = vunpack.c.h.b16 %v803
      %v829 = vunpack.c.l.b16 %v804
      %v830 = vunpack.c.h.b16 %v804
      %v831 = vpack.c.b16 %v829, %v827
      %v832 = vpack.c.b16 %v830, %v828
      %v836 = vsel %vm498, %v821, 0
      %v839 = vsel %vm498, %v822, 0
      %v842 = vsel %vm498, %v823, 0
      %v845 = vsel %vm498, %v824, 0
      %847 = vmatpush.bf16.msra.mxu0 0
      %848 = vmatpush.bf16.msra.mxu0 0
      %849 = vmatpush.bf16.msra.mxu0 0
      %850 = vmatpush.bf16.msra.mxu0 0
      %851 = vmatpush.bf16.msra.mxu0 0
      %852 = vmatpush.bf16.msra.mxu0 0
      %853 = vmatpush.bf16.msra.mxu0 0
      %854 = vmatpush.bf16.msra.mxu0 %v831
      %855 = vmatmul.bf16.gmra.mxu0 %v836
      %v856 = vpop.f32.mrf.mxu0
      %v857 = vadd.f32 0.0, %v856
      %v858 = vpop.f32.mrf.mxu0
      %v859 = vadd.f32 0.0, %v858
      %860 = vmatmul.bf16.gmra.mxu0 %v839
      %v861 = vpop.f32.mrf.mxu0
      %v862 = vadd.f32 0.0, %v861
      %v863 = vpop.f32.mrf.mxu0
      %v864 = vadd.f32 0.0, %v863
      %865 = vmatmul.bf16.gmra.mxu0 %v842
      %v866 = vpop.f32.mrf.mxu0
      %v867 = vadd.f32 0.0, %v866
      %v868 = vpop.f32.mrf.mxu0
      %v869 = vadd.f32 0.0, %v868
      %870 = vmatmul.bf16.gmra.mxu0 %v845
      %v871 = vpop.f32.mrf.mxu0
      %v872 = vadd.f32 0.0, %v871
      %v873 = vpop.f32.mrf.mxu0
      %v874 = vadd.f32 0.0, %v873
      %875 = vdwg.mxu0
      %876 = vmatpush.bf16.msra.mxu0 0
      %877 = vmatpush.bf16.msra.mxu0 0
      %878 = vmatpush.bf16.msra.mxu0 0
      %879 = vmatpush.bf16.msra.mxu0 0
      %880 = vmatpush.bf16.msra.mxu0 0
      %881 = vmatpush.bf16.msra.mxu0 0
      %882 = vmatpush.bf16.msra.mxu0 0
      %883 = vmatpush.bf16.msra.mxu0 %v832
      %884 = vmatmul.bf16.gmra.mxu0 %v836
      %v885 = vpop.f32.mrf.mxu0
      %v886 = vadd.f32 0.0, %v885
      %v887 = vpop.f32.mrf.mxu0
      %v888 = vadd.f32 0.0, %v887
      %889 = vmatmul.bf16.gmra.mxu0 %v839
      %v890 = vpop.f32.mrf.mxu0
      %v891 = vadd.f32 0.0, %v890
      %v892 = vpop.f32.mrf.mxu0
      %v893 = vadd.f32 0.0, %v892
      %894 = vmatmul.bf16.gmra.mxu0 %v842
      %v895 = vpop.f32.mrf.mxu0
      %v896 = vadd.f32 0.0, %v895
      %v897 = vpop.f32.mrf.mxu0
      %v898 = vadd.f32 0.0, %v897
      %899 = vmatmul.bf16.gmra.mxu0 %v845
      %v900 = vpop.f32.mrf.mxu0
      %v901 = vadd.f32 0.0, %v900
      %v902 = vpop.f32.mrf.mxu0
      %v903 = vadd.f32 0.0, %v902
      %904 = vdwg.mxu0
      %v905 = vadd.f32 %v779, %v857
      %v906 = vadd.f32 %v780, %v886
      %v907 = vadd.f32 %v781, %v859
      %v908 = vadd.f32 %v782, %v888
      %v909 = vadd.f32 %v783, %v862
      %v910 = vadd.f32 %v784, %v891
      %v911 = vadd.f32 %v785, %v864
      %v912 = vadd.f32 %v786, %v893
      %v913 = vadd.f32 %v787, %v867
      %v914 = vadd.f32 %v788, %v896
      %v915 = vadd.f32 %v789, %v869
      %v916 = vadd.f32 %v790, %v898
      %v917 = vadd.f32 %v791, %v872
      %v918 = vadd.f32 %v792, %v901
      %v919 = vadd.f32 %v793, %v874
      %v920 = vadd.f32 %v794, %v903
      %v921 = vld [vmem:[%s8] sm:$0xff]
      %v922 = vld [vmem:[%s8 + $0x8] sm:$0xff]
      %v923 = vld [vmem:[%s8 + $0x10] sm:$0xff]
      %v924 = vld [vmem:[%s8 + $0x18] sm:$0xff]
      %v925 = vld [vmem:[%s8 + $0x20] sm:$0xff]
      %v926 = vld [vmem:[%s8 + $0x28] sm:$0xff]
      %v927 = vld [vmem:[%s8 + $0x30] sm:$0xff]
      %v928 = vld [vmem:[%s8 + $0x38] sm:$0xff]
      %930 = vset.pattern.permute.xlu0 0
      %931 = vperm.xlu0 %930, %v921
      %v932 = vpop.permute.xlu0 %931
      %935 = vset.pattern.permute.xlu0 0
      %936 = vperm.xlu0 %935, %v922
      %v937 = vpop.permute.xlu0 %936
      %940 = vset.pattern.permute.xlu0 0
      %941 = vperm.xlu0 %940, %v923
      %v942 = vpop.permute.xlu0 %941
      %945 = vset.pattern.permute.xlu0 0
      %946 = vperm.xlu0 %945, %v924
      %v947 = vpop.permute.xlu0 %946
      %950 = vset.pattern.permute.xlu0 0
      %951 = vperm.xlu0 %950, %v925
      %v952 = vpop.permute.xlu0 %951
      %955 = vset.pattern.permute.xlu0 0
      %956 = vperm.xlu0 %955, %v926
      %v957 = vpop.permute.xlu0 %956
      %960 = vset.pattern.permute.xlu0 0
      %961 = vperm.xlu0 %960, %v927
      %v962 = vpop.permute.xlu0 %961
      %965 = vset.pattern.permute.xlu0 0
      %966 = vperm.xlu0 %965, %v928
      %v967 = vpop.permute.xlu0 %966
      %v969 = vadd.f32 %v905, %v932
      %v970 = vadd.f32 %v906, %v932
      %v971 = vadd.f32 %v907, %v937
      %v972 = vadd.f32 %v908, %v937
      %v973 = vadd.f32 %v909, %v942
      %v974 = vadd.f32 %v910, %v942
      %v975 = vadd.f32 %v911, %v947
      %v976 = vadd.f32 %v912, %v947
      %v977 = vadd.f32 %v913, %v952
      %v978 = vadd.f32 %v914, %v952
      %v979 = vadd.f32 %v915, %v957
      %v980 = vadd.f32 %v916, %v957
      %v981 = vadd.f32 %v917, %v962
      %v982 = vadd.f32 %v918, %v962
      %v983 = vadd.f32 %v919, %v967
      %v984 = vadd.f32 %v920, %v967
      %v985 = vmax.f32 %v969, 0.0
      %v986 = vmax.f32 %v970, 0.0
      %v987 = vmax.f32 %v971, 0.0
      %v988 = vmax.f32 %v972, 0.0
      %v989 = vmax.f32 %v973, 0.0
      %v990 = vmax.f32 %v974, 0.0
      %v991 = vmax.f32 %v975, 0.0
      %v992 = vmax.f32 %v976, 0.0
      %v993 = vmax.f32 %v977, 0.0
      %v994 = vmax.f32 %v978, 0.0
      %v995 = vmax.f32 %v979, 0.0
      %v996 = vmax.f32 %v980, 0.0
      %v997 = vmax.f32 %v981, 0.0
      %v998 = vmax.f32 %v982, 0.0
      %v999 = vmax.f32 %v983, 0.0
      %v1000 = vmax.f32 %v984, 0.0
      %v1001 = vpack.c.bf16 %v987, %v985
      %v1002 = vpack.c.bf16 %v988, %v986
      %v1003 = vpack.c.bf16 %v991, %v989
      %v1004 = vpack.c.bf16 %v992, %v990
      %v1005 = vpack.c.bf16 %v995, %v993
      %v1006 = vpack.c.bf16 %v996, %v994
      %v1007 = vpack.c.bf16 %v999, %v997
      %v1008 = vpack.c.bf16 %v1000, %v998
      %v1009 = vld [vmem:[%s9] sm:$0xf]
      %v1010 = vld [vmem:[%s9 + $0x4] sm:$0xf]
      %v1011 = vld [vmem:[%s9 + $0x8] sm:$0xf]
      %v1012 = vld [vmem:[%s9 + $0xc] sm:$0xf]
      %v1013 = vld [vmem:[%s9 + $0x10] sm:$0xf]
      %v1014 = vld [vmem:[%s9 + $0x14] sm:$0xf]
      %v1015 = vld [vmem:[%s9 + $0x18] sm:$0xf]
      %v1016 = vld [vmem:[%s9 + $0x1c] sm:$0xf]
      %v1017 = vld [vmem:[%s9 + $0x20] sm:$0xf]
      %v1018 = vld [vmem:[%s9 + $0x24] sm:$0xf]
      %v1019 = vld [vmem:[%s10] sm:$0xff]
      %v1020 = vld [vmem:[%s10 + $0x8] sm:$0xff]
      %v1021 = vld [vmem:[%s10 + $0x10] sm:$0xff]
      %v1022 = vld [vmem:[%s10 + $0x18] sm:$0xff]
      %v1023 = vld [vmem:[%s10 + $0x20] sm:$0xff]
      %v1024 = vld [vmem:[%s10 + $0x28] sm:$0xff]
      %v1025 = vld [vmem:[%s10 + $0x30] sm:$0xff]
      %v1026 = vld [vmem:[%s10 + $0x38] sm:$0xff]
      %v1027 = vld [vmem:[%s10 + $0x40] sm:$0xff]
      %v1028 = vld [vmem:[%s10 + $0x48] sm:$0xff]
      %1030 = vset.pattern.permute.xlu0 0
      %1031 = vperm.xlu0 %1030, %v1019
      %v1032 = vpop.permute.xlu0 %1031
      %1035 = vset.pattern.permute.xlu0 0
      %1036 = vperm.xlu0 %1035, %v1020
      %v1037 = vpop.permute.xlu0 %1036
      %1040 = vset.pattern.permute.xlu0 0
      %1041 = vperm.xlu0 %1040, %v1021
      %v1042 = vpop.permute.xlu0 %1041
      %1045 = vset.pattern.permute.xlu0 0
      %1046 = vperm.xlu0 %1045, %v1022
      %v1047 = vpop.permute.xlu0 %1046
      %1050 = vset.pattern.permute.xlu0 0
      %1051 = vperm.xlu0 %1050, %v1023
      %v1052 = vpop.permute.xlu0 %1051
      %1055 = vset.pattern.permute.xlu0 0
      %1056 = vperm.xlu0 %1055, %v1024
      %v1057 = vpop.permute.xlu0 %1056
      %1060 = vset.pattern.permute.xlu0 0
      %1061 = vperm.xlu0 %1060, %v1025
      %v1062 = vpop.permute.xlu0 %1061
      %1065 = vset.pattern.permute.xlu0 0
      %1066 = vperm.xlu0 %1065, %v1026
      %v1067 = vpop.permute.xlu0 %1066
      %1070 = vset.pattern.permute.xlu0 0
      %1071 = vperm.xlu0 %1070, %v1027
      %v1072 = vpop.permute.xlu0 %1071
      %1075 = vset.pattern.permute.xlu0 0
      %1076 = vperm.xlu0 %1075, %v1028
      %v1077 = vpop.permute.xlu0 %1076
      %v1089 = vunpack.c.l.b16 %v1009
      %v1090 = vunpack.c.l.b16 %v1010
      %v1091 = vunpack.c.l.b16 %v1011
      %v1092 = vunpack.c.l.b16 %v1012
      %v1093 = vunpack.c.l.b16 %v1013
      %v1094 = vunpack.c.l.b16 %v1014
      %v1095 = vunpack.c.l.b16 %v1015
      %v1096 = vunpack.c.l.b16 %v1016
      %v1097 = vunpack.c.l.b16 %v1017
      %v1098 = vunpack.c.l.b16 %v1018
      %v1099 = vpack.c.b16 %v1090, %v1089
      %v1100 = vpack.c.b16 %v1092, %v1091
      %v1101 = vpack.c.b16 %v1094, %v1093
      %v1102 = vpack.c.b16 %v1096, %v1095
      %v1103 = vpack.c.b16 %v1098, %v1097
      %vm1104 = vcmask 523264
      %v1106 = vsel %vm1104, %v1099, 0
      %v1109 = vsel %vm1104, %v1100, 0
      %v1112 = vsel %vm1104, %v1101, 0
      %v1115 = vsel %vm1104, %v1102, 0
      %v1118 = vsel %vm1104, %v1103, 0
      %1120 = vmatpush.bf16.msra.mxu0 0
      %1121 = vmatpush.bf16.msra.mxu0 0
      %1122 = vmatpush.bf16.msra.mxu0 0
      %1123 = vmatpush.bf16.msra.mxu0 0
      %1124 = vmatpush.bf16.msra.mxu0 %v1007
      %1125 = vmatpush.bf16.msra.mxu0 %v1005
      %1126 = vmatpush.bf16.msra.mxu0 %v1003
      %1127 = vmatpush.bf16.msra.mxu0 %v1001
      %1128 = vmatmul.bf16.gmra.mxu0 %v1106
      %v1129 = vpop.f32.mrf.mxu0
      %v1130 = vadd.f32 %v1032, %v1129
      %v1131 = vpop.f32.mrf.mxu0
      %v1132 = vadd.f32 %v1037, %v1131
      %1133 = vmatmul.bf16.gmra.mxu0 %v1109
      %v1134 = vpop.f32.mrf.mxu0
      %v1135 = vadd.f32 %v1042, %v1134
      %v1136 = vpop.f32.mrf.mxu0
      %v1137 = vadd.f32 %v1047, %v1136
      %1138 = vmatmul.bf16.gmra.mxu0 %v1112
      %v1139 = vpop.f32.mrf.mxu0
      %v1140 = vadd.f32 %v1052, %v1139
      %v1141 = vpop.f32.mrf.mxu0
      %v1142 = vadd.f32 %v1057, %v1141
      %1143 = vmatmul.bf16.gmra.mxu0 %v1115
      %v1144 = vpop.f32.mrf.mxu0
      %v1145 = vadd.f32 %v1062, %v1144
      %v1146 = vpop.f32.mrf.mxu0
      %v1147 = vadd.f32 %v1067, %v1146
      %1148 = vmatmul.bf16.gmra.mxu0 %v1118
      %v1149 = vpop.f32.mrf.mxu0
      %v1150 = vadd.f32 %v1072, %v1149
      %v1151 = vpop.f32.mrf.mxu0
      %v1152 = vadd.f32 %v1077, %v1151
      %1153 = vdwg.mxu0
      %1154 = vmatpush.bf16.msra.mxu0 0
      %1155 = vmatpush.bf16.msra.mxu0 0
      %1156 = vmatpush.bf16.msra.mxu0 0
      %1157 = vmatpush.bf16.msra.mxu0 0
      %1158 = vmatpush.bf16.msra.mxu0 %v1008
      %1159 = vmatpush.bf16.msra.mxu0 %v1006
      %1160 = vmatpush.bf16.msra.mxu0 %v1004
      %1161 = vmatpush.bf16.msra.mxu0 %v1002
      %1162 = vmatmul.bf16.gmra.mxu0 %v1106
      %v1163 = vpop.f32.mrf.mxu0
      %v1164 = vadd.f32 %v1032, %v1163
      %v1165 = vpop.f32.mrf.mxu0
      %v1166 = vadd.f32 %v1037, %v1165
      %1167 = vmatmul.bf16.gmra.mxu0 %v1109
      %v1168 = vpop.f32.mrf.mxu0
      %v1169 = vadd.f32 %v1042, %v1168
      %v1170 = vpop.f32.mrf.mxu0
      %v1171 = vadd.f32 %v1047, %v1170
      %1172 = vmatmul.bf16.gmra.mxu0 %v1112
      %v1173 = vpop.f32.mrf.mxu0
      %v1174 = vadd.f32 %v1052, %v1173
      %v1175 = vpop.f32.mrf.mxu0
      %v1176 = vadd.f32 %v1057, %v1175
      %1177 = vmatmul.bf16.gmra.mxu0 %v1115
      %v1178 = vpop.f32.mrf.mxu0
      %v1179 = vadd.f32 %v1062, %v1178
      %v1180 = vpop.f32.mrf.mxu0
      %v1181 = vadd.f32 %v1067, %v1180
      %1182 = vmatmul.bf16.gmra.mxu0 %v1118
      %v1183 = vpop.f32.mrf.mxu0
      %v1184 = vadd.f32 %v1072, %v1183
      %v1185 = vpop.f32.mrf.mxu0
      %v1186 = vadd.f32 %v1077, %v1185
      %1187 = vdwg.mxu0
      %v1188 = vmul.f32 %v1130, %v1130
      %v1189 = vmul.f32 %v1164, %v1164
      %v1190 = vrot.slane %v1188, 4
      %v1191 = vadd.f32 %v1188, %v1190
      %v1192 = vrot.slane %v1191, 2
      %v1193 = vadd.f32 %v1191, %v1192
      %v1194 = vrot.slane %v1193, 1
      %v1195 = vadd.f32 %v1193, %v1194
      %v1196 = vrot.slane %v1189, 4
      %v1197 = vadd.f32 %v1189, %v1196
      %v1198 = vrot.slane %v1197, 2
      %v1199 = vadd.f32 %v1197, %v1198
      %v1200 = vrot.slane %v1199, 1
      %v1201 = vadd.f32 %v1199, %v1200
      %v1202 = vrsqrt.pop %v1195
      %v1203 = vmul.f32 %v1202, %v1195
      %v1204 = vmul.f32 %v1203, %v1202
      %v1205 = vmul.f32 0.5, %v1204
      %v1206 = vsub.f32 1.5, %v1205
      %v1207 = vmul.f32 %v1202, %v1206
      %vm1208 = vweird.f32 %v1195
      %vm1209 = vweird.f32 %v1202
      %vm1210 = vmor %vm1208, %vm1209
      %v1211 = vsel %vm1210, %v1202, %v1207
      %v1212 = vrsqrt.pop %v1201
      %v1213 = vmul.f32 %v1212, %v1201
      %v1214 = vmul.f32 %v1213, %v1212
      %v1215 = vmul.f32 0.5, %v1214
      %v1216 = vsub.f32 1.5, %v1215
      %v1217 = vmul.f32 %v1212, %v1216
      %vm1218 = vweird.f32 %v1201
      %vm1219 = vweird.f32 %v1212
      %vm1220 = vmor %vm1218, %vm1219
      %v1221 = vsel %vm1220, %v1212, %v1217
      %v1222 = vmul.f32 %v1130, %v1211
      %v1223 = vmul.f32 %v1164, %v1221
      %v1224 = vmul.f32 %v1132, %v1132
      %v1225 = vmul.f32 %v1166, %v1166
      %v1226 = vrot.slane %v1224, 4
      %v1227 = vadd.f32 %v1224, %v1226
      %v1228 = vrot.slane %v1227, 2
      %v1229 = vadd.f32 %v1227, %v1228
      %v1230 = vrot.slane %v1229, 1
      %v1231 = vadd.f32 %v1229, %v1230
      %v1232 = vrot.slane %v1225, 4
      %v1233 = vadd.f32 %v1225, %v1232
      %v1234 = vrot.slane %v1233, 2
      %v1235 = vadd.f32 %v1233, %v1234
      %v1236 = vrot.slane %v1235, 1
      %v1237 = vadd.f32 %v1235, %v1236
      %v1238 = vrsqrt.pop %v1231
      %v1239 = vmul.f32 %v1238, %v1231
      %v1240 = vmul.f32 %v1239, %v1238
      %v1241 = vmul.f32 0.5, %v1240
      %v1242 = vsub.f32 1.5, %v1241
      %v1243 = vmul.f32 %v1238, %v1242
      %vm1244 = vweird.f32 %v1231
      %vm1245 = vweird.f32 %v1238
      %vm1246 = vmor %vm1244, %vm1245
      %v1247 = vsel %vm1246, %v1238, %v1243
      %v1248 = vrsqrt.pop %v1237
      %v1249 = vmul.f32 %v1248, %v1237
      %v1250 = vmul.f32 %v1249, %v1248
      %v1251 = vmul.f32 0.5, %v1250
      %v1252 = vsub.f32 1.5, %v1251
      %v1253 = vmul.f32 %v1248, %v1252
      %vm1254 = vweird.f32 %v1237
      %vm1255 = vweird.f32 %v1248
      %vm1256 = vmor %vm1254, %vm1255
      %v1257 = vsel %vm1256, %v1248, %v1253
      %v1258 = vmul.f32 %v1132, %v1247
      %v1259 = vmul.f32 %v1166, %v1257
      %v1260 = vadd.f32 %v1258, %v1259
      %1261 = vadd.xlane.f32.xlu0 %v1260
      %v1262 = vpop.xlane.xlu0 %1261
      %v1263 = vadd.f32 %v1262, 1e-06
      %v1264 = vmul.f32 %v1222, %v1263
      %v1265 = vmul.f32 %v1223, %v1263
      %v1266 = vrot.slane %v1264, 4
      %v1267 = vadd.f32 %v1264, %v1266
      %v1268 = vrot.slane %v1267, 2
      %v1269 = vadd.f32 %v1267, %v1268
      %v1270 = vrot.slane %v1269, 1
      %v1271 = vadd.f32 %v1269, %v1270
      %v1272 = vrot.slane %v1265, 4
      %v1273 = vadd.f32 %v1265, %v1272
      %v1274 = vrot.slane %v1273, 2
      %v1275 = vadd.f32 %v1273, %v1274
      %v1276 = vrot.slane %v1275, 1
      %v1277 = vadd.f32 %v1275, %v1276
      %v1278 = vadd.f32 %v1271, 256.0
      %v1279 = vadd.f32 %v1277, 256.0
      %v1280 = vrcp.pop %v1278
      %v1281 = vrcp.pop %v1279
      %v1282 = vadd.f32 %v1135, %v1169
      %1283 = vadd.xlane.f32.xlu0 %v1282
      %v1284 = vpop.xlane.xlu0 %1283
      %v1285 = vadd.f32 %v1137, %v1171
      %1286 = vadd.xlane.f32.xlu0 %v1285
      %v1287 = vpop.xlane.xlu0 %1286
      %v1288 = vadd.f32 %v1140, %v1174
      %1289 = vadd.xlane.f32.xlu0 %v1288
      %v1290 = vpop.xlane.xlu0 %1289
      %v1291 = vadd.f32 %v1142, %v1176
      %1292 = vadd.xlane.f32.xlu0 %v1291
      %v1293 = vpop.xlane.xlu0 %1292
      %v1294 = vadd.f32 %v1145, %v1179
      %1295 = vadd.xlane.f32.xlu0 %v1294
      %v1296 = vpop.xlane.xlu0 %1295
      %v1297 = vadd.f32 %v1147, %v1181
      %1298 = vadd.xlane.f32.xlu0 %v1297
      %v1299 = vpop.xlane.xlu0 %1298
      %v1300 = vadd.f32 %v1150, %v1184
      %1301 = vadd.xlane.f32.xlu0 %v1300
      %v1302 = vpop.xlane.xlu0 %1301
      %v1303 = vadd.f32 %v1152, %v1186
      %1304 = vadd.xlane.f32.xlu0 %v1303
      %v1305 = vpop.xlane.xlu0 %1304
      %v1306 = vpack.c.bf16 %v1222, %v1222
      %v1307 = vpack.c.bf16 %v1223, %v1223
      %v1308 = vpack.c.bf16 %v1258, %v1258
      %v1309 = vpack.c.bf16 %v1259, %v1259
      %v1310 = vpack.c.bf16 %v1137, %v1135
      %v1311 = vpack.c.bf16 %v1171, %v1169
      %v1312 = vpack.c.bf16 %v1142, %v1140
      %v1313 = vpack.c.bf16 %v1176, %v1174
      %v1314 = vpack.c.bf16 %v1147, %v1145
      %v1315 = vpack.c.bf16 %v1181, %v1179
      %v1316 = vpack.c.bf16 %v1152, %v1150
      %v1317 = vpack.c.bf16 %v1186, %v1184
      %1318 = vmatpush.bf16.xpose.msra.mxu0 0
      %1319 = vmatpush.bf16.xpose.msra.mxu0 0
      %1320 = vmatpush.bf16.xpose.msra.mxu0 0
      %1321 = vmatpush.bf16.xpose.msra.mxu0 0
      %1322 = vmatpush.bf16.xpose.msra.mxu0 0
      %1323 = vmatpush.bf16.xpose.msra.mxu0 0
      %1324 = vmatpush.bf16.xpose.msra.mxu0 0
      %1325 = vmatpush.bf16.xpose.msra.mxu0 %v1308
      %1326 = vmatmul.bf16.gmra.mxu0 %v1310
      %v1327 = vpop.f32.mrf.mxu0
      %v1328 = vadd.f32 0.0, %v1327
      %v1329 = vpop.f32.mrf.mxu0
      %v1330 = vadd.f32 0.0, %v1329
      %1331 = vmatmul.bf16.gmra.mxu0 %v1312
      %v1332 = vpop.f32.mrf.mxu0
      %v1333 = vadd.f32 0.0, %v1332
      %v1334 = vpop.f32.mrf.mxu0
      %v1335 = vadd.f32 0.0, %v1334
      %1336 = vmatmul.bf16.gmra.mxu0 %v1314
      %v1337 = vpop.f32.mrf.mxu0
      %v1338 = vadd.f32 0.0, %v1337
      %v1339 = vpop.f32.mrf.mxu0
      %v1340 = vadd.f32 0.0, %v1339
      %1341 = vmatmul.bf16.gmra.mxu0 %v1316
      %v1342 = vpop.f32.mrf.mxu0
      %v1343 = vadd.f32 0.0, %v1342
      %v1344 = vpop.f32.mrf.mxu0
      %v1345 = vadd.f32 0.0, %v1344
      %1346 = vdwg.mxu0
      %1347 = vmatpush.bf16.xpose.msra.mxu0 0
      %1348 = vmatpush.bf16.xpose.msra.mxu0 0
      %1349 = vmatpush.bf16.xpose.msra.mxu0 0
      %1350 = vmatpush.bf16.xpose.msra.mxu0 0
      %1351 = vmatpush.bf16.xpose.msra.mxu0 0
      %1352 = vmatpush.bf16.xpose.msra.mxu0 0
      %1353 = vmatpush.bf16.xpose.msra.mxu0 0
      %1354 = vmatpush.bf16.xpose.msra.mxu0 %v1309
      %1355 = vmatmul.bf16.gmra.mxu0 %v1311
      %v1356 = vpop.f32.mrf.mxu0
      %v1357 = vadd.f32 %v1328, %v1356
      %v1358 = vpop.f32.mrf.mxu0
      %v1359 = vadd.f32 %v1330, %v1358
      %1360 = vmatmul.bf16.gmra.mxu0 %v1313
      %v1361 = vpop.f32.mrf.mxu0
      %v1362 = vadd.f32 %v1333, %v1361
      %v1363 = vpop.f32.mrf.mxu0
      %v1364 = vadd.f32 %v1335, %v1363
      %1365 = vmatmul.bf16.gmra.mxu0 %v1315
      %v1366 = vpop.f32.mrf.mxu0
      %v1367 = vadd.f32 %v1338, %v1366
      %v1368 = vpop.f32.mrf.mxu0
      %v1369 = vadd.f32 %v1340, %v1368
      %1370 = vmatmul.bf16.gmra.mxu0 %v1317
      %v1371 = vpop.f32.mrf.mxu0
      %v1372 = vadd.f32 %v1343, %v1371
      %v1373 = vpop.f32.mrf.mxu0
      %v1374 = vadd.f32 %v1345, %v1373
      %1375 = vdwg.mxu0
      %v1376 = vpack.c.bf16 %v1359, %v1357
      %v1377 = vpack.c.bf16 %v1364, %v1362
      %v1378 = vpack.c.bf16 %v1369, %v1367
      %v1379 = vpack.c.bf16 %v1374, %v1372
      %vm1380 = vcmask 64512
      %v1382 = vsel %vm1380, %v1376, 0
      %v1385 = vsel %vm1380, %v1377, 0
      %v1388 = vsel %vm1380, %v1378, 0
      %v1391 = vsel %vm1380, %v1379, 0
      %vm1393 = vcmask 1043456
      %v1395 = vsel %vm1393, %v1306, 0
      %v1398 = vsel %vm1393, %v1307, 0
      %1400 = vmatpush.bf16.msra.mxu0 0
      %1401 = vmatpush.bf16.msra.mxu0 0
      %1402 = vmatpush.bf16.msra.mxu0 0
      %1403 = vmatpush.bf16.msra.mxu0 0
      %1404 = vmatpush.bf16.msra.mxu0 0
      %1405 = vmatpush.bf16.msra.mxu0 0
      %1406 = vmatpush.bf16.msra.mxu0 0
      %1407 = vmatpush.bf16.msra.mxu0 %v1395
      %1408 = vmatmul.bf16.gmra.mxu0 %v1382
      %v1409 = vpop.f32.mrf.mxu0
      %v1410 = vadd.f32 0.0, %v1409
      %v1411 = vpop.f32.mrf.mxu0
      %v1412 = vadd.f32 0.0, %v1411
      %1413 = vmatmul.bf16.gmra.mxu0 %v1385
      %v1414 = vpop.f32.mrf.mxu0
      %v1415 = vadd.f32 0.0, %v1414
      %v1416 = vpop.f32.mrf.mxu0
      %v1417 = vadd.f32 0.0, %v1416
      %1418 = vmatmul.bf16.gmra.mxu0 %v1388
      %v1419 = vpop.f32.mrf.mxu0
      %v1420 = vadd.f32 0.0, %v1419
      %v1421 = vpop.f32.mrf.mxu0
      %v1422 = vadd.f32 0.0, %v1421
      %1423 = vmatmul.bf16.gmra.mxu0 %v1391
      %v1424 = vpop.f32.mrf.mxu0
      %v1425 = vadd.f32 0.0, %v1424
      %v1426 = vpop.f32.mrf.mxu0
      %v1427 = vadd.f32 0.0, %v1426
      %1428 = vdwg.mxu0
      %1429 = vmatpush.bf16.msra.mxu0 0
      %1430 = vmatpush.bf16.msra.mxu0 0
      %1431 = vmatpush.bf16.msra.mxu0 0
      %1432 = vmatpush.bf16.msra.mxu0 0
      %1433 = vmatpush.bf16.msra.mxu0 0
      %1434 = vmatpush.bf16.msra.mxu0 0
      %1435 = vmatpush.bf16.msra.mxu0 0
      %1436 = vmatpush.bf16.msra.mxu0 %v1398
      %1437 = vmatmul.bf16.gmra.mxu0 %v1382
      %v1438 = vpop.f32.mrf.mxu0
      %v1439 = vadd.f32 0.0, %v1438
      %v1440 = vpop.f32.mrf.mxu0
      %v1441 = vadd.f32 0.0, %v1440
      %1442 = vmatmul.bf16.gmra.mxu0 %v1385
      %v1443 = vpop.f32.mrf.mxu0
      %v1444 = vadd.f32 0.0, %v1443
      %v1445 = vpop.f32.mrf.mxu0
      %v1446 = vadd.f32 0.0, %v1445
      %1447 = vmatmul.bf16.gmra.mxu0 %v1388
      %v1448 = vpop.f32.mrf.mxu0
      %v1449 = vadd.f32 0.0, %v1448
      %v1450 = vpop.f32.mrf.mxu0
      %v1451 = vadd.f32 0.0, %v1450
      %1452 = vmatmul.bf16.gmra.mxu0 %v1391
      %v1453 = vpop.f32.mrf.mxu0
      %v1454 = vadd.f32 0.0, %v1453
      %v1455 = vpop.f32.mrf.mxu0
      %v1456 = vadd.f32 0.0, %v1455
      %1457 = vdwg.mxu0
      %v1458 = vadd.f32 %v1284, %v1410
      %v1459 = vadd.f32 %v1284, %v1439
      %v1460 = vadd.f32 %v1287, %v1412
      %v1461 = vadd.f32 %v1287, %v1441
      %v1462 = vadd.f32 %v1290, %v1415
      %v1463 = vadd.f32 %v1290, %v1444
      %v1464 = vadd.f32 %v1293, %v1417
      %v1465 = vadd.f32 %v1293, %v1446
      %v1466 = vadd.f32 %v1296, %v1420
      %v1467 = vadd.f32 %v1296, %v1449
      %v1468 = vadd.f32 %v1299, %v1422
      %v1469 = vadd.f32 %v1299, %v1451
      %v1470 = vadd.f32 %v1302, %v1425
      %v1471 = vadd.f32 %v1302, %v1454
      %v1472 = vadd.f32 %v1305, %v1427
      %v1473 = vadd.f32 %v1305, %v1456
      %v1474 = vmul.f32 %v1458, %v1280
      %v1475 = vmul.f32 %v1459, %v1281
      %v1476 = vmul.f32 %v1460, %v1280
      %v1477 = vmul.f32 %v1461, %v1281
      %v1478 = vmul.f32 %v1462, %v1280
      %v1479 = vmul.f32 %v1463, %v1281
      %v1480 = vmul.f32 %v1464, %v1280
      %v1481 = vmul.f32 %v1465, %v1281
      %v1482 = vmul.f32 %v1466, %v1280
      %v1483 = vmul.f32 %v1467, %v1281
      %v1484 = vmul.f32 %v1468, %v1280
      %v1485 = vmul.f32 %v1469, %v1281
      %v1486 = vmul.f32 %v1470, %v1280
      %v1487 = vmul.f32 %v1471, %v1281
      %v1488 = vmul.f32 %v1472, %v1280
      %v1489 = vmul.f32 %v1473, %v1281
      %v1490 = vadd.f32 %v1474, %v985
      %v1491 = vadd.f32 %v1475, %v986
      %v1492 = vadd.f32 %v1476, %v987
      %v1493 = vadd.f32 %v1477, %v988
      %v1494 = vadd.f32 %v1478, %v989
      %v1495 = vadd.f32 %v1479, %v990
      %v1496 = vadd.f32 %v1480, %v991
      %v1497 = vadd.f32 %v1481, %v992
      %v1498 = vadd.f32 %v1482, %v993
      %v1499 = vadd.f32 %v1483, %v994
      %v1500 = vadd.f32 %v1484, %v995
      %v1501 = vadd.f32 %v1485, %v996
      %v1502 = vadd.f32 %v1486, %v997
      %v1503 = vadd.f32 %v1487, %v998
      %v1504 = vadd.f32 %v1488, %v999
      %v1505 = vadd.f32 %v1489, %v1000
      %1506 = vst [vmem:[%s446] sm:$0xff] %v1490
      %1507 = vst [vmem:[%s446 + $0x8] sm:$0xff] %v1491
      %1508 = vst [vmem:[%s446 + $0x10] sm:$0xff] %v1492
      %1509 = vst [vmem:[%s446 + $0x18] sm:$0xff] %v1493
      %1510 = vst [vmem:[%s446 + $0x20] sm:$0xff] %v1494
      %1511 = vst [vmem:[%s446 + $0x28] sm:$0xff] %v1495
      %1512 = vst [vmem:[%s446 + $0x30] sm:$0xff] %v1496
      %1513 = vst [vmem:[%s446 + $0x38] sm:$0xff] %v1497
      %1514 = vst [vmem:[%s446 + $0x40] sm:$0xff] %v1498
      %1515 = vst [vmem:[%s446 + $0x48] sm:$0xff] %v1499
      %1516 = vst [vmem:[%s446 + $0x50] sm:$0xff] %v1500
      %1517 = vst [vmem:[%s446 + $0x58] sm:$0xff] %v1501
      %1518 = vst [vmem:[%s446 + $0x60] sm:$0xff] %v1502
      %1519 = vst [vmem:[%s446 + $0x68] sm:$0xff] %v1503
      %1520 = vst [vmem:[%s446 + $0x70] sm:$0xff] %v1504
      %1521 = vst [vmem:[%s446 + $0x78] sm:$0xff] %v1505
      %p1522 = scmp.lt.s32.totalorder %s22, 1
      %s1523 = scalar_select %p1522, %s22, 1
      %s1524 = smul.addr %s1523, 16
      %s1525 = smul.addr %s1524, 8
      %s1526 = scalar_lea.vmem %s11, %s1525
      // Predicated region
      $region65: #{_lambda_.1} parent=63 // pred_check
        %p1527 = pneg %p291
      $region66: #{_lambda_.1} parent=63 // pred_check_branch
        %1529 = sbr.rel (%p1527) target = $region68
      $region67: #{_lambda_.1} parent=63 // pred_region
        _
      $region68: #{_lambda_.1} parent=63 // pred_fallthru
        _
    $region64: #{_lambda_.1} parent=5 // pred_fallthru
      _
    %p1530 = scmp.le.s32.totalorder 2, %s17
    // Predicated region
    $region69: #{_lambda_.1} parent=5 // pred_check
      %p1531 = pneg %p1530
    $region70: #{_lambda_.1} parent=5 // pred_check_branch
      %1533 = sbr.rel (%p1531) target = $region72
    $region71: #{_lambda_.1} parent=5 // pred_region
      %s1534 = ssub.s32 %s17, 2
      // Predicated region
      $region73: #{_lambda_.1} parent=71 // pred_check
        %p1535 = pneg %p297
      $region74: #{_lambda_.1} parent=71 // pred_check_branch
        %1537 = sbr.rel (%p1535) target = $region76
      $region75: #{_lambda_.1} parent=71 // pred_region
        %p1538 = scmp.lt.s32.totalorder %s23, 1
        %s1539 = scalar_select %p1538, %s23, 1
        %s1540 = smul.addr %s1539, 16
        %s1541 = smul.addr %s1540, 8
        %s1542 = scalar_lea.vmem %s11, %s1541
      $region76: #{_lambda_.1} parent=71 // pred_fallthru
        _
    $region72: #{_lambda_.1} parent=5 // pred_fallthru
      _
  $region6: #{_lambda_.1} parent=0 // loop_footer
    %s21 = sadd.s32 1, %s17
  $region7: #{_lambda_.1} parent=0 // loop_footer_branch
    %16 = sbr.rel target = $region3
  $region8: #{_lambda_.1} parent=0 // loop_exit
    _

</llo_original>
